<compile_context>
chip_gen: v6e
topology: v6e:2x2x1
jax: 0.10.0
libtpu: 0.0.40
codegen_flags: <defaults>
</compile_context>

<pallas_src>
import functools
import math

import jax
import jax.numpy as jnp
from jax import lax
from jax.experimental import pallas as pl
from jax.experimental.pallas import tpu as pltpu

_SILU_AT_ONE = 1.0 / (1.0 + math.exp(-1.0))   # SiLU(P0) = SiLU(1), a constant


def _silu(v):
    # v * sigmoid(v); exp and the approximate reciprocal both run on the EUP.
    return v * pl.reciprocal(1.0 + jnp.exp(-v), approx=True)


def _round_up(a, m):
    return (a + m - 1) // m * m


def _tile_bytes(shape, itemsize):
    """Rough lane-padded VMEM footprint of one block (last dims -> (8, 128))."""
    lead = 1
    for d in shape[:-2]:
        lead *= int(d)
    sub = _round_up(int(shape[-2]), 8)
    lane = _round_up(int(shape[-1]), 128)
    return lead * sub * lane * itemsize


# ---------------------------------------------------------------------------
# Fused kernel: tanh -> Gram recurrence -> SiLU -> im2col (roll+mask) -> 1 dot
# ---------------------------------------------------------------------------
def _kagn_fused_kernel(beta_ref, masks_ref, x_ref, w_ref, o_ref, gb_ref,
                       col_ref, *, degree, cg, K, k, HW, W, padding, dilation,
                       Bt):
    # beta_ref : (degree+1,)      f32   SMEM  Gram beta weights
    # masks_ref: (k*k, HW)        f32   VMEM  per-tap edge masks (resident)
    # x_ref    : (Bt, cg, HW)     f32   VMEM  batch tile of one group's input
    # w_ref    : (co_g, k*k*K)    bf16  VMEM  this group's flattened weights
    # o_ref    : (Bt, co_g, HW)   f32   VMEM  lane-dense output block
    # gb_ref   : (Bt*K, HW)       f32   VMEM  Gram basis, rows = (bi, d*cg + c)
    # col_ref  : (k*k*K, Bt*HW)   bf16  VMEM  im2col scratch (fully rewritten)
    t = jnp.tanh(x_ref[...])

    def emit(d, v):            # v: (Bt, cg, HW), already SiLU-activated
        for bi in range(Bt):
            gb_ref[bi * K + d * cg: bi * K + (d + 1) * cg, :] = v[bi]

    # Gram recurrence, degree-major / channel-minor rows (matches the
    # torch.cat([p0, p1, ...], dim=1) input-channel order of the weights).
    emit(0, jnp.full_like(t, _SILU_AT_ONE))
    if degree >= 1:
        p0, p1 = jnp.ones_like(t), t
        emit(1, _silu(p1))
        for d in range(2, degree + 1):
            n = d - 1
            # beta(n, d) = (d+n)(d-n) n^2 (4n^2-1) / d^2 * beta_weights[n]
            cnd = (d + n) * (d - n) * (n * n) * (4.0 * n * n - 1.0) / (d * d)
            p2 = t * p1 - (cnd * beta_ref[n]) * p0
            emit(d, _silu(p2))
            p0, p1 = p1, p2

    gb = gb_ref[...]                              # (Bt*K, HW) f32
    masks = masks_ref[...]                        # (k*k, HW)  f32 {0, 1}

    # im2col: tap (i, j)'s row-block is the flat basis rolled by -(a*W + b) and
    # edge-masked; the masks also realize the conv's zero padding, so nothing
    # is ever zero-filled.
    for i in range(k):
        for j in range(k):
            tap = i * k + j
            a = i * dilation - padding
            b = j * dilation - padding
            shift = (-(a * W + b)) % HW
            v = gb if shift == 0 else pltpu.roll(gb, shift, axis=1)
            if a != 0 or b != 0:
                v = v * masks[tap:tap + 1, :]
            v = v.astype(col_ref.dtype)           # single bf16 cast per tap
            for bi in range(Bt):
                col_ref[tap * K:(tap + 1) * K, bi * HW:(bi + 1) * HW] = (
                    v[bi * K:(bi + 1) * K, :])

    # One fused MXU matmul: (co_g, k*k*K) @ (k*k*K, Bt*HW), f32 accumulation.
    res = jnp.dot(w_ref[...], col_ref[...], preferred_element_type=jnp.float32)
    for bi in range(Bt):
        o_ref[bi] = res[:, bi * HW:(bi + 1) * HW].astype(o_ref.dtype)


# ---------------------------------------------------------------------------
# Full forward pass (mirrors KAGNExpert.forward, ndim=2, dropout=0)
# ---------------------------------------------------------------------------
def kagn_expert_forward(x, poly_w, beta_w, *, degree, groups, kernel_size,
                        padding=0, stride=1, dilation=1,
                        mxu_dtype=jnp.bfloat16, out_dtype=jnp.float32,
                        batch_tile=None):
    B, Cin, H, W = x.shape
    G = groups
    cg = Cin // G
    co_g = poly_w.shape[1]
    k = kernel_size
    K = (degree + 1) * cg
    TK = k * k * K
    HW = H * W
    span = dilation * (k - 1)
    Hout = (H + 2 * padding - span - 1) // stride + 1
    Wout = (W + 2 * padding - span - 1) // stride + 1
    if 2 * padding > span:
        # TODO(synk): over-padded convs need output corners outside the input
        # grid, which the flat-shift im2col formulation does not cover.
        raise NotImplementedError("2*padding > dilation*(kernel_size-1)")

    # Batch tile: widen the matmul N axis (Bt*H*W) while keeping the im2col
    # scratch inside a small VMEM budget.
    if batch_tile is None:
        batch_tile = 1
        for cand in range(1, B + 1):
            if B % cand:
                continue
            if cand * HW * TK * 2 > (4 << 20):
                break
            batch_tile = cand
            if cand * HW >= 512:
                break
    Bt = batch_tile
    assert B % Bt == 0

    xg = x.reshape(B, G, cg, HW).astype(jnp.float32)            # free reshape
    # (G, co_g, K, k, k) -> (G, co_g, k*k*K): tap-major, channel-minor columns,
    # matching the im2col row order.  Tiny one-time transpose, cast to bf16.
    w_prep = jnp.transpose(poly_w, (0, 1, 3, 4, 2)).reshape(G, co_g, TK)
    w_prep = w_prep.astype(mxu_dtype)
    beta_w = beta_w.astype(jnp.float32)

    # Per-tap validity masks over the flat (H*W) corner grid (f32 {0, 1}).
    oh = jnp.arange(H, dtype=jnp.int32)[:, None]
    ow = jnp.arange(W, dtype=jnp.int32)[None, :]
    mask_list = []
    for i in range(k):
        for j in range(k):
            a = i * dilation - padding
            b = j * dilation - padding
            m = ((oh + a >= 0) & (oh + a < H) & (ow + b >= 0) & (ow + b < W))
            mask_list.append(m.reshape(HW))
    masks = jnp.stack(mask_list, axis=0).astype(jnp.float32)    # (k*k, HW)

    kern = functools.partial(
        _kagn_fused_kernel, degree=degree, cg=cg, K=K, k=k, HW=HW, W=W,
        padding=padding, dilation=dilation, Bt=Bt)

    # Explicit VMEM budget (lane-padded, double-buffered blocks + scratch),
    # capped at v7x's 64 MiB per-TensorCore VMEM.
    o_bytes = jnp.dtype(out_dtype).itemsize
    m_bytes = jnp.dtype(mxu_dtype).itemsize
    est = (2 * _tile_bytes((Bt, cg, HW), 4)            # x block
           + 2 * _tile_bytes((co_g, TK), m_bytes)      # weight block
           + 2 * _tile_bytes((Bt, co_g, HW), o_bytes)  # output block
           + 2 * _tile_bytes((k * k, HW), 4)           # masks
           + _tile_bytes((Bt * K, HW), 4)              # gram-basis scratch
           + _tile_bytes((TK, Bt * HW), m_bytes))      # im2col scratch
    vmem_limit = int(min(64 * 1024 * 1024, max(4 * 1024 * 1024, 2 * est)))

    out = pl.pallas_call(
        kern,
        out_shape=jax.ShapeDtypeStruct((B, G, co_g, HW), out_dtype),
        grid_spec=pltpu.PrefetchScalarGridSpec(
            num_scalar_prefetch=0,
            grid=(G, B // Bt),    # group outer: weight block resident over bt
            in_specs=[
                pl.BlockSpec(memory_space=pltpu.MemorySpace.SMEM),     # beta
                pl.BlockSpec((k * k, HW), lambda g, bt: (0, 0)),       # masks
                pl.BlockSpec((Bt, None, cg, HW),
                             lambda g, bt: (bt, g, 0, 0)),             # x tile
                pl.BlockSpec((None, co_g, TK),
                             lambda g, bt: (g, 0, 0)),                 # weights
            ],
            out_specs=pl.BlockSpec((Bt, None, co_g, HW),
                                   lambda g, bt: (bt, g, 0, 0)),
            scratch_shapes=[pltpu.VMEM((Bt * K, HW), jnp.float32),
                            pltpu.VMEM((TK, Bt * HW), mxu_dtype)],
        ),
        compiler_params=pltpu.CompilerParams(
            dimension_semantics=("parallel", "parallel"),
            vmem_limit_bytes=vmem_limit),
    )(beta_w, masks, xg, w_prep)

    # (B, G, co_g, H*W) -> (B, Cout, H, W): pure reshape; channel order already
    # matches torch.cat over groups.
    y = out.astype(jnp.float32) if out_dtype != jnp.float32 else out
    y = y.reshape(B, G * co_g, H, W)
    if stride != 1 or Hout != H or Wout != W:
        # TODO(synk): dense compute + wrapper subsample for stride>1 / valid
        # convs; correct but wastes MXU columns.
        y = y[:, :, :(Hout - 1) * stride + 1:stride,
              :(Wout - 1) * stride + 1:stride]
    return y


# ---------------------------------------------------------------------------
# Plain-JAX reference for verification
# ---------------------------------------------------------------------------
def ref_forward(x, poly_w, beta_w, *, degree, groups, kernel_size,
                padding, stride, dilation):
    B, Cin, H, W = x.shape
    cg = Cin // groups
    outs = []
    for g in range(groups):
        t = jnp.tanh(x[:, g * cg:(g + 1) * cg])
        p0 = jnp.ones_like(t)
        polys = [p0]
        if degree >= 1:
            p1 = t
            polys.append(p1)
            for d in range(2, degree + 1):
                n, m = d - 1, d
                c = (m + n) * (m - n) * (n * n) * (4.0 * n * n - 1.0) / (m * m)
                p2 = t * p1 - c * beta_w[n] * p0
                polys.append(p2)
                p0, p1 = p1, p2
        gb = jax.nn.silu(jnp.concatenate(polys, axis=1))
        y = lax.conv_general_dilated(
            gb, poly_w[g],
            window_strides=(stride, stride),
            padding=[(padding, padding), (padding, padding)],
            rhs_dilation=(dilation, dilation),
            dimension_numbers=("NCHW", "OIHW", "NCHW"),
            precision=lax.Precision.HIGHEST)
        outs.append(y)
    return jnp.concatenate(outs, axis=1)


if __name__ == "__main__":
    # Module config: conv_w_fun=conv2d, ndim=2, dropout=0.0
    B, Cin, H, W = 2, 4, 16, 16
    Cout, groups, degree, ksz = 8, 2, 3, 3
    padding, stride, dilation = 1, 1, 1

    key = jax.random.PRNGKey(0)
    k_x, k_w, k_b = jax.random.split(key, 3)
    x = jax.random.normal(k_x, (B, Cin, H, W), jnp.float32)

    # poly_weights: (groups, outdim//groups, inputdim*(degree+1)//groups, k, k)
    in_k = Cin * (degree + 1) // groups
    poly_shape = (groups, Cout // groups, in_k, ksz, ksz)
    fan_in = (Cout // groups) * in_k * ksz * ksz      # torch kaiming fan_in
    bound = (3.0 / fan_in) ** 0.5                     # kaiming_uniform_, linear
    poly_w = jax.random.uniform(k_w, poly_shape, jnp.float32, -bound, bound)

    # beta_weights: normal(0, 1/(k^ndim * input_dim * (degree+1)))
    beta_std = 1.0 / (ksz ** 2 * Cin * (degree + 1.0))
    beta_w = beta_std * jax.random.normal(k_b, (degree + 1,), jnp.float32)

    fwd = jax.jit(functools.partial(
        kagn_expert_forward, degree=degree, groups=groups, kernel_size=ksz,
        padding=padding, stride=stride, dilation=dilation))

    y = fwd(x, poly_w, beta_w)
    y = jax.block_until_ready(y)

    y_ref = ref_forward(x, poly_w, beta_w, degree=degree, groups=groups,
                        kernel_size=ksz, padding=padding, stride=stride,
                        dilation=dilation)

    assert y.shape == (B, Cout, H, W), y.shape
    max_err = float(jnp.max(jnp.abs(y - y_ref)))
    # bf16 MXU operands + approx-reciprocal SiLU vs the f32 HIGHEST reference.
    assert jnp.allclose(y, y_ref, atol=2e-2, rtol=2e-2), max_err

    print("KERNEL_OK")
</pallas_src>

<mosaic_0001>
module attributes {stable_mosaic.version = 11 : i64} {
  func.func @_kagn_fused_kernel(%arg0: i32, %arg1: i32, %arg2: memref<4xf32, #tpu.memory_space<smem>>, %arg3: memref<9x256xf32, #tpu.memory_space<vmem>>, %arg4: memref<2x1x2x256xf32, #tpu.memory_space<vmem>>, %arg5: memref<1x4x72xbf16, #tpu.memory_space<vmem>>, %arg6: memref<2x1x4x256xf32, #tpu.memory_space<vmem>>, %arg7: memref<16x256xf32, #tpu.memory_space<vmem>>, %arg8: memref<72x512xbf16, #tpu.memory_space<vmem>>) attributes {dimension_semantics = [#tpu.dimension_semantics<parallel>, #tpu.dimension_semantics<parallel>], iteration_bounds = array<i64: 2, 1>, scalar_prefetch = 0 : i64, scratch_operands = 2 : i64, tpu.core_type = #tpu.core_type<tc>, window_params = [{transform_indices = @transform_0, window_bounds = array<i64: 4>}, {pipeline_mode = #tpu.pipeline_mode<synchronous>, transform_indices = @transform_1, window_bounds = array<i64: 9, 256>}, {transform_indices = @transform_2, window_bounds = array<i64: 2, 1, 2, 256>}, {transform_indices = @transform_3, window_bounds = array<i64: 1, 4, 72>}, {transform_indices = @transform_4, window_bounds = array<i64: 2, 1, 4, 256>}]} {
    %c0 = arith.constant 0 : index
    %c0_0 = arith.constant 0 : index
    %c0_1 = arith.constant 0 : index
    %c0_2 = arith.constant 0 : index
    %0 = vector.load %arg4[%c0, %c0_0, %c0_1, %c0_2] : memref<2x1x2x256xf32, #tpu.memory_space<vmem>>, vector<2x1x2x256xf32>
    %1 = vector.shape_cast %0 : vector<2x1x2x256xf32> to vector<2x2x256xf32>
    %2 = math.tanh %1 : vector<2x2x256xf32>
    %cst = arith.constant 0.731058597 : f32
    %3 = vector.broadcast %cst : f32 to vector<2x2x256xf32>
    %4 = vector.extract_strided_slice %3 {offsets = [0, 0, 0], sizes = [1, 2, 256], strides = [1, 1, 1]} : vector<2x2x256xf32> to vector<1x2x256xf32>
    %5 = vector.shape_cast %4 : vector<1x2x256xf32> to vector<2x256xf32>
    %c0_3 = arith.constant 0 : index
    %c0_4 = arith.constant 0 : index
    %6 = vector.load %arg7[%c0_3, %c0_4] : memref<16x256xf32, #tpu.memory_space<vmem>>, vector<2x256xf32>
    tpu.vector_store %arg7[%c0_3, %c0_4], %5 {strides = array<i32>} : memref<16x256xf32, #tpu.memory_space<vmem>>, vector<2x256xf32>,
    %7 = vector.extract_strided_slice %3 {offsets = [1, 0, 0], sizes = [1, 2, 256], strides = [1, 1, 1]} : vector<2x2x256xf32> to vector<1x2x256xf32>
    %8 = vector.shape_cast %7 : vector<1x2x256xf32> to vector<2x256xf32>
    %c8 = arith.constant 8 : index
    %c0_5 = arith.constant 0 : index
    %9 = vector.load %arg7[%c8, %c0_5] : memref<16x256xf32, #tpu.memory_space<vmem>>, vector<2x256xf32>
    tpu.vector_store %arg7[%c8, %c0_5], %8 {strides = array<i32>} : memref<16x256xf32, #tpu.memory_space<vmem>>, vector<2x256xf32>,
    %cst_6 = arith.constant 1.000000e+00 : f32
    %10 = vector.broadcast %cst_6 : f32 to vector<2x2x256xf32>
    %cst_7 = arith.constant 0.000000e+00 : f32
    %11 = vector.broadcast %cst_7 : f32 to vector<2x2x256xf32>
    %12 = arith.subf %11, %2 : vector<2x2x256xf32>
    %13 = math.exp %12 : vector<2x2x256xf32>
    %cst_8 = arith.constant 1.000000e+00 : f32
    %14 = vector.broadcast %cst_8 : f32 to vector<2x2x256xf32>
    %15 = arith.addf %14, %13 : vector<2x2x256xf32>
    %16 = tpu.reciprocal %15 {approx = true} : vector<2x2x256xf32> -> vector<2x2x256xf32>
    %17 = arith.mulf %2, %16 : vector<2x2x256xf32>
    %18 = vector.extract_strided_slice %17 {offsets = [0, 0, 0], sizes = [1, 2, 256], strides = [1, 1, 1]} : vector<2x2x256xf32> to vector<1x2x256xf32>
    %19 = vector.shape_cast %18 : vector<1x2x256xf32> to vector<2x256xf32>
    %c2 = arith.constant 2 : index
    %c0_9 = arith.constant 0 : index
    %20 = vector.load %arg7[%c2, %c0_9] : memref<16x256xf32, #tpu.memory_space<vmem>>, vector<2x256xf32>
    tpu.vector_store %arg7[%c2, %c0_9], %19 {strides = array<i32>} : memref<16x256xf32, #tpu.memory_space<vmem>>, vector<2x256xf32>,
    %21 = vector.extract_strided_slice %17 {offsets = [1, 0, 0], sizes = [1, 2, 256], strides = [1, 1, 1]} : vector<2x2x256xf32> to vector<1x2x256xf32>
    %22 = vector.shape_cast %21 : vector<1x2x256xf32> to vector<2x256xf32>
    %c10 = arith.constant 10 : index
    %c0_10 = arith.constant 0 : index
    %23 = vector.load %arg7[%c10, %c0_10] : memref<16x256xf32, #tpu.memory_space<vmem>>, vector<2x256xf32>
    tpu.vector_store %arg7[%c10, %c0_10], %22 {strides = array<i32>} : memref<16x256xf32, #tpu.memory_space<vmem>>, vector<2x256xf32>,
    %24 = arith.mulf %2, %2 : vector<2x2x256xf32>
    %c1 = arith.constant 1 : index
    %25 = memref.load %arg2[%c1] : memref<4xf32, #tpu.memory_space<smem>>
    %cst_11 = arith.constant 2.250000e+00 : f32
    %26 = arith.mulf %cst_11, %25 : f32
    %27 = vector.broadcast %26 : f32 to vector<2x2x256xf32>
    %28 = arith.mulf %27, %10 : vector<2x2x256xf32>
    %29 = arith.subf %24, %28 : vector<2x2x256xf32>
    %cst_12 = arith.constant 0.000000e+00 : f32
    %30 = vector.broadcast %cst_12 : f32 to vector<2x2x256xf32>
    %31 = arith.subf %30, %29 : vector<2x2x256xf32>
    %32 = math.exp %31 : vector<2x2x256xf32>
    %cst_13 = arith.constant 1.000000e+00 : f32
    %33 = vector.broadcast %cst_13 : f32 to vector<2x2x256xf32>
    %34 = arith.addf %33, %32 : vector<2x2x256xf32>
    %35 = tpu.reciprocal %34 {approx = true} : vector<2x2x256xf32> -> vector<2x2x256xf32>
    %36 = arith.mulf %29, %35 : vector<2x2x256xf32>
    %37 = vector.extract_strided_slice %36 {offsets = [0, 0, 0], sizes = [1, 2, 256], strides = [1, 1, 1]} : vector<2x2x256xf32> to vector<1x2x256xf32>
    %38 = vector.shape_cast %37 : vector<1x2x256xf32> to vector<2x256xf32>
    %c4 = arith.constant 4 : index
    %c0_14 = arith.constant 0 : index
    %39 = vector.load %arg7[%c4, %c0_14] : memref<16x256xf32, #tpu.memory_space<vmem>>, vector<2x256xf32>
    tpu.vector_store %arg7[%c4, %c0_14], %38 {strides = array<i32>} : memref<16x256xf32, #tpu.memory_space<vmem>>, vector<2x256xf32>,
    %40 = vector.extract_strided_slice %36 {offsets = [1, 0, 0], sizes = [1, 2, 256], strides = [1, 1, 1]} : vector<2x2x256xf32> to vector<1x2x256xf32>
    %41 = vector.shape_cast %40 : vector<1x2x256xf32> to vector<2x256xf32>
    %c12 = arith.constant 12 : index
    %c0_15 = arith.constant 0 : index
    %42 = vector.load %arg7[%c12, %c0_15] : memref<16x256xf32, #tpu.memory_space<vmem>>, vector<2x256xf32>
    tpu.vector_store %arg7[%c12, %c0_15], %41 {strides = array<i32>} : memref<16x256xf32, #tpu.memory_space<vmem>>, vector<2x256xf32>,
    %43 = arith.mulf %2, %29 : vector<2x2x256xf32>
    %c2_16 = arith.constant 2 : index
    %44 = memref.load %arg2[%c2_16] : memref<4xf32, #tpu.memory_space<smem>>
    %cst_17 = arith.constant 33.3333321 : f32
    %45 = arith.mulf %cst_17, %44 : f32
    %46 = vector.broadcast %45 : f32 to vector<2x2x256xf32>
    %47 = arith.mulf %46, %2 : vector<2x2x256xf32>
    %48 = arith.subf %43, %47 : vector<2x2x256xf32>
    %cst_18 = arith.constant 0.000000e+00 : f32
    %49 = vector.broadcast %cst_18 : f32 to vector<2x2x256xf32>
    %50 = arith.subf %49, %48 : vector<2x2x256xf32>
    %51 = math.exp %50 : vector<2x2x256xf32>
    %cst_19 = arith.constant 1.000000e+00 : f32
    %52 = vector.broadcast %cst_19 : f32 to vector<2x2x256xf32>
    %53 = arith.addf %52, %51 : vector<2x2x256xf32>
    %54 = tpu.reciprocal %53 {approx = true} : vector<2x2x256xf32> -> vector<2x2x256xf32>
    %55 = arith.mulf %48, %54 : vector<2x2x256xf32>
    %56 = vector.extract_strided_slice %55 {offsets = [0, 0, 0], sizes = [1, 2, 256], strides = [1, 1, 1]} : vector<2x2x256xf32> to vector<1x2x256xf32>
    %57 = vector.shape_cast %56 : vector<1x2x256xf32> to vector<2x256xf32>
    %c6 = arith.constant 6 : index
    %c0_20 = arith.constant 0 : index
    %58 = vector.load %arg7[%c6, %c0_20] : memref<16x256xf32, #tpu.memory_space<vmem>>, vector<2x256xf32>
    tpu.vector_store %arg7[%c6, %c0_20], %57 {strides = array<i32>} : memref<16x256xf32, #tpu.memory_space<vmem>>, vector<2x256xf32>,
    %59 = vector.extract_strided_slice %55 {offsets = [1, 0, 0], sizes = [1, 2, 256], strides = [1, 1, 1]} : vector<2x2x256xf32> to vector<1x2x256xf32>
    %60 = vector.shape_cast %59 : vector<1x2x256xf32> to vector<2x256xf32>
    %c14 = arith.constant 14 : index
    %c0_21 = arith.constant 0 : index
    %61 = vector.load %arg7[%c14, %c0_21] : memref<16x256xf32, #tpu.memory_space<vmem>>, vector<2x256xf32>
    tpu.vector_store %arg7[%c14, %c0_21], %60 {strides = array<i32>} : memref<16x256xf32, #tpu.memory_space<vmem>>, vector<2x256xf32>,
    %c0_22 = arith.constant 0 : index
    %c0_23 = arith.constant 0 : index
    %62 = vector.load %arg7[%c0_22, %c0_23] : memref<16x256xf32, #tpu.memory_space<vmem>>, vector<16x256xf32>
    %c0_24 = arith.constant 0 : index
    %c0_25 = arith.constant 0 : index
    %63 = vector.load %arg3[%c0_24, %c0_25] : memref<9x256xf32, #tpu.memory_space<vmem>>, vector<9x256xf32>
    %c17_i32 = arith.constant 17 : i32
    %64 = tpu.dynamic_rotate %62 by %c17_i32 dim 1 : vector<16x256xf32>, i32 -> vector<16x256xf32>
    %65 = vector.extract_strided_slice %63 {offsets = [0, 0], sizes = [1, 256], strides = [1, 1]} : vector<9x256xf32> to vector<1x256xf32>
    %66 = vector.broadcast %65 : vector<1x256xf32> to vector<16x256xf32>
    %67 = arith.mulf %64, %66 : vector<16x256xf32>
    %68 = arith.truncf %67 : vector<16x256xf32> to vector<16x256xbf16>
    %69 = vector.extract_strided_slice %68 {offsets = [0, 0], sizes = [8, 256], strides = [1, 1]} : vector<16x256xbf16> to vector<8x256xbf16>
    %c0_26 = arith.constant 0 : index
    %c0_27 = arith.constant 0 : index
    %70 = vector.load %arg8[%c0_26, %c0_27] : memref<72x512xbf16, #tpu.memory_space<vmem>>, vector<8x256xbf16>
    tpu.vector_store %arg8[%c0_26, %c0_27], %69 {strides = array<i32>} : memref<72x512xbf16, #tpu.memory_space<vmem>>, vector<8x256xbf16>,
    %71 = vector.extract_strided_slice %68 {offsets = [8, 0], sizes = [8, 256], strides = [1, 1]} : vector<16x256xbf16> to vector<8x256xbf16>
    %c0_28 = arith.constant 0 : index
    %c256 = arith.constant 256 : index
    %72 = vector.load %arg8[%c0_28, %c256] : memref<72x512xbf16, #tpu.memory_space<vmem>>, vector<8x256xbf16>
    tpu.vector_store %arg8[%c0_28, %c256], %71 {strides = array<i32>} : memref<72x512xbf16, #tpu.memory_space<vmem>>, vector<8x256xbf16>,
    %c16_i32 = arith.constant 16 : i32
    %73 = tpu.dynamic_rotate %62 by %c16_i32 dim 1 : vector<16x256xf32>, i32 -> vector<16x256xf32>
    %74 = vector.extract_strided_slice %63 {offsets = [1, 0], sizes = [1, 256], strides = [1, 1]} : vector<9x256xf32> to vector<1x256xf32>
    %75 = vector.broadcast %74 : vector<1x256xf32> to vector<16x256xf32>
    %76 = arith.mulf %73, %75 : vector<16x256xf32>
    %77 = arith.truncf %76 : vector<16x256xf32> to vector<16x256xbf16>
    %78 = vector.extract_strided_slice %77 {offsets = [0, 0], sizes = [8, 256], strides = [1, 1]} : vector<16x256xbf16> to vector<8x256xbf16>
    %c8_29 = arith.constant 8 : index
    %c0_30 = arith.constant 0 : index
    %79 = vector.load %arg8[%c8_29, %c0_30] : memref<72x512xbf16, #tpu.memory_space<vmem>>, vector<8x256xbf16>
    tpu.vector_store %arg8[%c8_29, %c0_30], %78 {strides = array<i32>} : memref<72x512xbf16, #tpu.memory_space<vmem>>, vector<8x256xbf16>,
    %80 = vector.extract_strided_slice %77 {offsets = [8, 0], sizes = [8, 256], strides = [1, 1]} : vector<16x256xbf16> to vector<8x256xbf16>
    %c8_31 = arith.constant 8 : index
    %c256_32 = arith.constant 256 : index
    %81 = vector.load %arg8[%c8_31, %c256_32] : memref<72x512xbf16, #tpu.memory_space<vmem>>, vector<8x256xbf16>
    tpu.vector_store %arg8[%c8_31, %c256_32], %80 {strides = array<i32>} : memref<72x512xbf16, #tpu.memory_space<vmem>>, vector<8x256xbf16>,
    %c15_i32 = arith.constant 15 : i32
    %82 = tpu.dynamic_rotate %62 by %c15_i32 dim 1 : vector<16x256xf32>, i32 -> vector<16x256xf32>
    %83 = vector.extract_strided_slice %63 {offsets = [2, 0], sizes = [1, 256], strides = [1, 1]} : vector<9x256xf32> to vector<1x256xf32>
    %84 = vector.broadcast %83 : vector<1x256xf32> to vector<16x256xf32>
    %85 = arith.mulf %82, %84 : vector<16x256xf32>
    %86 = arith.truncf %85 : vector<16x256xf32> to vector<16x256xbf16>
    %87 = vector.extract_strided_slice %86 {offsets = [0, 0], sizes = [8, 256], strides = [1, 1]} : vector<16x256xbf16> to vector<8x256xbf16>
    %c16 = arith.constant 16 : index
    %c0_33 = arith.constant 0 : index
    %88 = vector.load %arg8[%c16, %c0_33] : memref<72x512xbf16, #tpu.memory_space<vmem>>, vector<8x256xbf16>
    tpu.vector_store %arg8[%c16, %c0_33], %87 {strides = array<i32>} : memref<72x512xbf16, #tpu.memory_space<vmem>>, vector<8x256xbf16>,
    %89 = vector.extract_strided_slice %86 {offsets = [8, 0], sizes = [8, 256], strides = [1, 1]} : vector<16x256xbf16> to vector<8x256xbf16>
    %c16_34 = arith.constant 16 : index
    %c256_35 = arith.constant 256 : index
    %90 = vector.load %arg8[%c16_34, %c256_35] : memref<72x512xbf16, #tpu.memory_space<vmem>>, vector<8x256xbf16>
    tpu.vector_store %arg8[%c16_34, %c256_35], %89 {strides = array<i32>} : memref<72x512xbf16, #tpu.memory_space<vmem>>, vector<8x256xbf16>,
    %c1_i32 = arith.constant 1 : i32
    %91 = tpu.dynamic_rotate %62 by %c1_i32 dim 1 : vector<16x256xf32>, i32 -> vector<16x256xf32>
    %92 = vector.extract_strided_slice %63 {offsets = [3, 0], sizes = [1, 256], strides = [1, 1]} : vector<9x256xf32> to vector<1x256xf32>
    %93 = vector.broadcast %92 : vector<1x256xf32> to vector<16x256xf32>
    %94 = arith.mulf %91, %93 : vector<16x256xf32>
    %95 = arith.truncf %94 : vector<16x256xf32> to vector<16x256xbf16>
    %96 = vector.extract_strided_slice %95 {offsets = [0, 0], sizes = [8, 256], strides = [1, 1]} : vector<16x256xbf16> to vector<8x256xbf16>
    %c24 = arith.constant 24 : index
    %c0_36 = arith.constant 0 : index
    %97 = vector.load %arg8[%c24, %c0_36] : memref<72x512xbf16, #tpu.memory_space<vmem>>, vector<8x256xbf16>
    tpu.vector_store %arg8[%c24, %c0_36], %96 {strides = array<i32>} : memref<72x512xbf16, #tpu.memory_space<vmem>>, vector<8x256xbf16>,
    %98 = vector.extract_strided_slice %95 {offsets = [8, 0], sizes = [8, 256], strides = [1, 1]} : vector<16x256xbf16> to vector<8x256xbf16>
    %c24_37 = arith.constant 24 : index
    %c256_38 = arith.constant 256 : index
    %99 = vector.load %arg8[%c24_37, %c256_38] : memref<72x512xbf16, #tpu.memory_space<vmem>>, vector<8x256xbf16>
    tpu.vector_store %arg8[%c24_37, %c256_38], %98 {strides = array<i32>} : memref<72x512xbf16, #tpu.memory_space<vmem>>, vector<8x256xbf16>,
    %100 = arith.truncf %62 : vector<16x256xf32> to vector<16x256xbf16>
    %101 = vector.extract_strided_slice %100 {offsets = [0, 0], sizes = [8, 256], strides = [1, 1]} : vector<16x256xbf16> to vector<8x256xbf16>
    %c32 = arith.constant 32 : index
    %c0_39 = arith.constant 0 : index
    %102 = vector.load %arg8[%c32, %c0_39] : memref<72x512xbf16, #tpu.memory_space<vmem>>, vector<8x256xbf16>
    tpu.vector_store %arg8[%c32, %c0_39], %101 {strides = array<i32>} : memref<72x512xbf16, #tpu.memory_space<vmem>>, vector<8x256xbf16>,
    %103 = vector.extract_strided_slice %100 {offsets = [8, 0], sizes = [8, 256], strides = [1, 1]} : vector<16x256xbf16> to vector<8x256xbf16>
    %c32_40 = arith.constant 32 : index
    %c256_41 = arith.constant 256 : index
    %104 = vector.load %arg8[%c32_40, %c256_41] : memref<72x512xbf16, #tpu.memory_space<vmem>>, vector<8x256xbf16>
    tpu.vector_store %arg8[%c32_40, %c256_41], %103 {strides = array<i32>} : memref<72x512xbf16, #tpu.memory_space<vmem>>, vector<8x256xbf16>,
    %c255_i32 = arith.constant 255 : i32
    %105 = tpu.dynamic_rotate %62 by %c255_i32 dim 1 : vector<16x256xf32>, i32 -> vector<16x256xf32>
    %106 = vector.extract_strided_slice %63 {offsets = [5, 0], sizes = [1, 256], strides = [1, 1]} : vector<9x256xf32> to vector<1x256xf32>
    %107 = vector.broadcast %106 : vector<1x256xf32> to vector<16x256xf32>
    %108 = arith.mulf %105, %107 : vector<16x256xf32>
    %109 = arith.truncf %108 : vector<16x256xf32> to vector<16x256xbf16>
    %110 = vector.extract_strided_slice %109 {offsets = [0, 0], sizes = [8, 256], strides = [1, 1]} : vector<16x256xbf16> to vector<8x256xbf16>
    %c40 = arith.constant 40 : index
    %c0_42 = arith.constant 0 : index
    %111 = vector.load %arg8[%c40, %c0_42] : memref<72x512xbf16, #tpu.memory_space<vmem>>, vector<8x256xbf16>
    tpu.vector_store %arg8[%c40, %c0_42], %110 {strides = array<i32>} : memref<72x512xbf16, #tpu.memory_space<vmem>>, vector<8x256xbf16>,
    %112 = vector.extract_strided_slice %109 {offsets = [8, 0], sizes = [8, 256], strides = [1, 1]} : vector<16x256xbf16> to vector<8x256xbf16>
    %c40_43 = arith.constant 40 : index
    %c256_44 = arith.constant 256 : index
    %113 = vector.load %arg8[%c40_43, %c256_44] : memref<72x512xbf16, #tpu.memory_space<vmem>>, vector<8x256xbf16>
    tpu.vector_store %arg8[%c40_43, %c256_44], %112 {strides = array<i32>} : memref<72x512xbf16, #tpu.memory_space<vmem>>, vector<8x256xbf16>,
    %c241_i32 = arith.constant 241 : i32
    %114 = tpu.dynamic_rotate %62 by %c241_i32 dim 1 : vector<16x256xf32>, i32 -> vector<16x256xf32>
    %115 = vector.extract_strided_slice %63 {offsets = [6, 0], sizes = [1, 256], strides = [1, 1]} : vector<9x256xf32> to vector<1x256xf32>
    %116 = vector.broadcast %115 : vector<1x256xf32> to vector<16x256xf32>
    %117 = arith.mulf %114, %116 : vector<16x256xf32>
    %118 = arith.truncf %117 : vector<16x256xf32> to vector<16x256xbf16>
    %119 = vector.extract_strided_slice %118 {offsets = [0, 0], sizes = [8, 256], strides = [1, 1]} : vector<16x256xbf16> to vector<8x256xbf16>
    %c48 = arith.constant 48 : index
    %c0_45 = arith.constant 0 : index
    %120 = vector.load %arg8[%c48, %c0_45] : memref<72x512xbf16, #tpu.memory_space<vmem>>, vector<8x256xbf16>
    tpu.vector_store %arg8[%c48, %c0_45], %119 {strides = array<i32>} : memref<72x512xbf16, #tpu.memory_space<vmem>>, vector<8x256xbf16>,
    %121 = vector.extract_strided_slice %118 {offsets = [8, 0], sizes = [8, 256], strides = [1, 1]} : vector<16x256xbf16> to vector<8x256xbf16>
    %c48_46 = arith.constant 48 : index
    %c256_47 = arith.constant 256 : index
    %122 = vector.load %arg8[%c48_46, %c256_47] : memref<72x512xbf16, #tpu.memory_space<vmem>>, vector<8x256xbf16>
    tpu.vector_store %arg8[%c48_46, %c256_47], %121 {strides = array<i32>} : memref<72x512xbf16, #tpu.memory_space<vmem>>, vector<8x256xbf16>,
    %c240_i32 = arith.constant 240 : i32
    %123 = tpu.dynamic_rotate %62 by %c240_i32 dim 1 : vector<16x256xf32>, i32 -> vector<16x256xf32>
    %124 = vector.extract_strided_slice %63 {offsets = [7, 0], sizes = [1, 256], strides = [1, 1]} : vector<9x256xf32> to vector<1x256xf32>
    %125 = vector.broadcast %124 : vector<1x256xf32> to vector<16x256xf32>
    %126 = arith.mulf %123, %125 : vector<16x256xf32>
    %127 = arith.truncf %126 : vector<16x256xf32> to vector<16x256xbf16>
    %128 = vector.extract_strided_slice %127 {offsets = [0, 0], sizes = [8, 256], strides = [1, 1]} : vector<16x256xbf16> to vector<8x256xbf16>
    %c56 = arith.constant 56 : index
    %c0_48 = arith.constant 0 : index
    %129 = vector.load %arg8[%c56, %c0_48] : memref<72x512xbf16, #tpu.memory_space<vmem>>, vector<8x256xbf16>
    tpu.vector_store %arg8[%c56, %c0_48], %128 {strides = array<i32>} : memref<72x512xbf16, #tpu.memory_space<vmem>>, vector<8x256xbf16>,
    %130 = vector.extract_strided_slice %127 {offsets = [8, 0], sizes = [8, 256], strides = [1, 1]} : vector<16x256xbf16> to vector<8x256xbf16>
    %c56_49 = arith.constant 56 : index
    %c256_50 = arith.constant 256 : index
    %131 = vector.load %arg8[%c56_49, %c256_50] : memref<72x512xbf16, #tpu.memory_space<vmem>>, vector<8x256xbf16>
    tpu.vector_store %arg8[%c56_49, %c256_50], %130 {strides = array<i32>} : memref<72x512xbf16, #tpu.memory_space<vmem>>, vector<8x256xbf16>,
    %c239_i32 = arith.constant 239 : i32
    %132 = tpu.dynamic_rotate %62 by %c239_i32 dim 1 : vector<16x256xf32>, i32 -> vector<16x256xf32>
    %133 = vector.extract_strided_slice %63 {offsets = [8, 0], sizes = [1, 256], strides = [1, 1]} : vector<9x256xf32> to vector<1x256xf32>
    %134 = vector.broadcast %133 : vector<1x256xf32> to vector<16x256xf32>
    %135 = arith.mulf %132, %134 : vector<16x256xf32>
    %136 = arith.truncf %135 : vector<16x256xf32> to vector<16x256xbf16>
    %137 = vector.extract_strided_slice %136 {offsets = [0, 0], sizes = [8, 256], strides = [1, 1]} : vector<16x256xbf16> to vector<8x256xbf16>
    %c64 = arith.constant 64 : index
    %c0_51 = arith.constant 0 : index
    %138 = vector.load %arg8[%c64, %c0_51] : memref<72x512xbf16, #tpu.memory_space<vmem>>, vector<8x256xbf16>
    tpu.vector_store %arg8[%c64, %c0_51], %137 {strides = array<i32>} : memref<72x512xbf16, #tpu.memory_space<vmem>>, vector<8x256xbf16>,
    %139 = vector.extract_strided_slice %136 {offsets = [8, 0], sizes = [8, 256], strides = [1, 1]} : vector<16x256xbf16> to vector<8x256xbf16>
    %c64_52 = arith.constant 64 : index
    %c256_53 = arith.constant 256 : index
    %140 = vector.load %arg8[%c64_52, %c256_53] : memref<72x512xbf16, #tpu.memory_space<vmem>>, vector<8x256xbf16>
    tpu.vector_store %arg8[%c64_52, %c256_53], %139 {strides = array<i32>} : memref<72x512xbf16, #tpu.memory_space<vmem>>, vector<8x256xbf16>,
    %c0_54 = arith.constant 0 : index
    %c0_55 = arith.constant 0 : index
    %c0_56 = arith.constant 0 : index
    %141 = vector.load %arg5[%c0_54, %c0_55, %c0_56] : memref<1x4x72xbf16, #tpu.memory_space<vmem>>, vector<1x4x72xbf16>
    %142 = vector.shape_cast %141 : vector<1x4x72xbf16> to vector<4x72xbf16>
    %c0_57 = arith.constant 0 : index
    %c0_58 = arith.constant 0 : index
    %143 = vector.load %arg8[%c0_57, %c0_58] : memref<72x512xbf16, #tpu.memory_space<vmem>>, vector<72x512xbf16>
    %cst_59 = arith.constant dense<0.000000e+00> : vector<4x512xf32>
    %144 = tpu.matmul %142, %143, %cst_59 {dimension_numbers = #tpu.dot_dimension_numbers<[1], [0], [0], [1], [0, 0, 1, 1], [], []>} : vector<4x72xbf16>, vector<72x512xbf16>, vector<4x512xf32> -> vector<4x512xf32>
    %145 = vector.extract_strided_slice %144 {offsets = [0, 0], sizes = [4, 256], strides = [1, 1]} : vector<4x512xf32> to vector<4x256xf32>
    %c0_60 = arith.constant 0 : index
    %c0_61 = arith.constant 0 : index
    %c0_62 = arith.constant 0 : index
    %c0_63 = arith.constant 0 : index
    %146 = vector.load %arg6[%c0_60, %c0_61, %c0_62, %c0_63] : memref<2x1x4x256xf32, #tpu.memory_space<vmem>>, vector<1x1x4x256xf32>
    %147 = vector.shape_cast %146 : vector<1x1x4x256xf32> to vector<4x256xf32>
    %148 = vector.shape_cast %145 : vector<4x256xf32> to vector<1x1x4x256xf32>
    tpu.vector_store %arg6[%c0_60, %c0_61, %c0_62, %c0_63], %148 {strides = array<i32>} : memref<2x1x4x256xf32, #tpu.memory_space<vmem>>, vector<1x1x4x256xf32>,
    %149 = vector.extract_strided_slice %144 {offsets = [0, 256], sizes = [4, 256], strides = [1, 1]} : vector<4x512xf32> to vector<4x256xf32>
    %c1_64 = arith.constant 1 : index
    %c0_65 = arith.constant 0 : index
    %c0_66 = arith.constant 0 : index
    %c0_67 = arith.constant 0 : index
    %150 = vector.load %arg6[%c1_64, %c0_65, %c0_66, %c0_67] : memref<2x1x4x256xf32, #tpu.memory_space<vmem>>, vector<1x1x4x256xf32>
    %151 = vector.shape_cast %150 : vector<1x1x4x256xf32> to vector<4x256xf32>
    %152 = vector.shape_cast %149 : vector<4x256xf32> to vector<1x1x4x256xf32>
    tpu.vector_store %arg6[%c1_64, %c0_65, %c0_66, %c0_67], %152 {strides = array<i32>} : memref<2x1x4x256xf32, #tpu.memory_space<vmem>>, vector<1x1x4x256xf32>,
    return
  }
  func.func @transform_0(%arg0: i32, %arg1: i32) -> i32 {
    %c0_i32 = arith.constant 0 : i32
    %c0_i32_0 = arith.constant 0 : i32
    return %c0_i32 : i32
  }
  func.func @transform_1(%arg0: i32, %arg1: i32) -> (i32, i32) {
    %c0_i32 = arith.constant 0 : i32
    %c0_i32_0 = arith.constant 0 : i32
    %c0_i32_1 = arith.constant 0 : i32
    return %c0_i32, %c0_i32_0 : i32, i32
  }
  func.func @transform_2(%arg0: i32, %arg1: i32) -> (i32, i32, i32, i32) {
    %c0_i32 = arith.constant 0 : i32
    %c0_i32_0 = arith.constant 0 : i32
    %c0_i32_1 = arith.constant 0 : i32
    return %arg1, %arg0, %c0_i32, %c0_i32_0 : i32, i32, i32, i32
  }
  func.func @transform_3(%arg0: i32, %arg1: i32) -> (i32, i32, i32) {
    %c0_i32 = arith.constant 0 : i32
    %c0_i32_0 = arith.constant 0 : i32
    %c0_i32_1 = arith.constant 0 : i32
    return %arg0, %c0_i32, %c0_i32_0 : i32, i32, i32
  }
  func.func @transform_4(%arg0: i32, %arg1: i32) -> (i32, i32, i32, i32) {
    %c0_i32 = arith.constant 0 : i32
    %c0_i32_0 = arith.constant 0 : i32
    %c0_i32_1 = arith.constant 0 : i32
    return %arg1, %arg0, %c0_i32, %c0_i32_0 : i32, i32, i32, i32
  }
}

</mosaic_0001>

<llo_original>
// kernel: kagn_expert_forward.1
$region0: #{kagn_expert_forward.1}
  #allocation0 [shape = 'u32[]', space=smem, size = 0x4, offset = 0x4, fixed_abs, tag = 'smem constant byte address 0x4 - core index']
  #allocation1 [shape = 'u32[144,128]{1,0:T(1,128)}', space=vmem, size = 0x12000, scoped, tag = 'internal scratch']
  #allocation2 [shape = 'f32[16,256]{1,0:T(8,128)}', space=vmem, size = 0x4000, scoped, tag = 'scratch operand']
  #allocation3 [shape = 'bf16[72,512]{1,0:T(8,128)(2,1)}', space=vmem, size = 0x12000, scoped, tag = 'scratch operand']
  %s0 = inlined_call_operand.vmem [shape: f32[4], index: 0, kind: input, shape index: {}]
  %s1 = inlined_call_operand.vmem [shape: f32[9,256], index: 1, kind: input, shape index: {}]
  %s2 = inlined_call_operand.vmem [shape: f32[2,2,2,256], index: 2, kind: input, shape index: {}]
  %s3 = inlined_call_operand.vmem [shape: bf16[2,4,72], index: 3, kind: input, shape index: {}]
  %s4 = inlined_call_operand.vmem [shape: f32[2,2,4,256], index: 4, kind: output, shape index: {}]
  %s5 = sld [smem:[#allocation0]]
  $region128: #{kagn_expert_forward.1} parent=0
    _
  %s7 = ssub.s32 1, %s5
  %s8 = scalar_select 0, %s7, %s5
  $region1: #{kagn_expert_forward.1} parent=0
    #allocation4 [shape = 'u8[512]{0}', space=smem, size = 0x200, scoped, tag = 'input window, operand 0, single buffered']
    #allocation5 [shape = 's32[2]{0}', space=sflag, size = 0x8, scoped, tag = 'scoped memory for kagn_expert_forward.1']
    #allocation6 [shape = 'u8[8192]{0}', space=vmem, size = 0x2000, scoped, tag = 'input window, operand 2']
    #allocation7 [shape = 'u8[16384]{0}', space=vmem, size = 0x4000, scoped, tag = 'output window, operand 0']
    %9 = vsyncpa [#allocation5], 0
    loop: start=0, step=1, limit=4
    $region2: #{kagn_expert_forward.1} parent=1 // loop_pre_header
      _
    $region3: #{kagn_expert_forward.1} parent=1 // loop_header
      %s11 = sphi 0, %s15
      %p12 = scmp.ge.s32.totalorder %s11, 4
      %s18 = sphi 0, %s30
      %s19 = sphi 0, %s26
      %s20 = sphi 0, %s18
      %s21 = sphi 0, %s19
      %s22 = sphi 0, %s20
      %s23 = sphi 0, %s21
      %s31 = sphi 0, %s31
      %s33 = sphi 0, %s31
      %s34 = sphi 0, %s33
      %s48 = sphi 0, %s34
      %s52 = sphi 0, %s52
      %s54 = sphi 0, %s52
      %s55 = sphi 0, %s54
      %s69 = sphi 0, %s55
      %s77 = sphi 0, %s79
      %s80 = sphi 0, %s77
      %s81 = sphi 0, %s80
      %s97 = sphi 0, %s81
      %s103 = sphi 0, %s105
      %s106 = sphi 0, %s103
      %s107 = sphi 0, %s106
      %s123 = sphi 0, %s107
      %s131 = sphi 0, %s133
      %s134 = sphi 0, %s131
      %s135 = sphi 0, %s134
      %s151 = sphi 0, %s135
    $region4: #{kagn_expert_forward.1} parent=1 // loop_header_branch
      %14 = sbr.rel (%p12) target = $region8
    $region5: #{kagn_expert_forward.1} parent=1 // loop_body
      %s16 = ssub.s32 %s11, 1
      %s17 = ssub.s32 %s11, 2
      %s24 = sadd.s32 1, %s19
      %p25 = scmp.ge.s32.totalorder %s24, 1
      %s26 = scalar_select %p25, 0, %s24
      %s27 = sadd.s32 1, %s18
      %s28 = scalar_select %p25, %s27, %s18
      %p29 = scmp.ge.s32.totalorder %s28, 2
      %s30 = scalar_select %p29, 0, %s28
      %s32 = sadd.s32 %s31, 1
      %p35 = scmp.eq.s32.totalorder %s11, 1
      %p36 = scmp.ne.s32.totalorder %s31, %s33
      %p37 = scmp.eq.s32.totalorder %s11, 0
      %p38 = por %p36, %p37
      %p39 = scmp.ne.s32.totalorder %s31, %s33
      %p40 = scmp.eq.s32.totalorder %s16, 1
      %p41 = por %p39, %p40
      %p42 = scmp.ne.s32.totalorder %s33, %s34
      %p43 = scmp.eq.s32.totalorder %s16, 0
      %p44 = por %p42, %p43
      %p45 = scmp.ne.s32.totalorder %s33, %s34
      %p46 = scmp.eq.s32.totalorder %s17, 1
      %p47 = por %p45, %p46
      %p49 = scmp.ne.s32.totalorder %s34, %s48
      %p50 = scmp.eq.s32.totalorder %s17, 0
      %p51 = por %p49, %p50
      %s53 = sadd.s32 %s52, 1
      %p56 = scmp.eq.s32.totalorder %s11, 1
      %p57 = scmp.ne.s32.totalorder %s52, %s54
      %p58 = scmp.eq.s32.totalorder %s11, 0
      %p59 = por %p57, %p58
      %p60 = scmp.ne.s32.totalorder %s52, %s54
      %p61 = scmp.eq.s32.totalorder %s16, 1
      %p62 = por %p60, %p61
      %p63 = scmp.ne.s32.totalorder %s54, %s55
      %p64 = scmp.eq.s32.totalorder %s16, 0
      %p65 = por %p63, %p64
      %p66 = scmp.ne.s32.totalorder %s54, %s55
      %p67 = scmp.eq.s32.totalorder %s17, 1
      %p68 = por %p66, %p67
      %p70 = scmp.ne.s32.totalorder %s55, %s69
      %p71 = scmp.eq.s32.totalorder %s17, 0
      %p72 = por %p70, %p71
      %s73 = ssub.s32 %s19, %s26
      %s74 = ssub.s32 %s18, %s30
      %s75 = sor.u32 %s73, %s74
      %p76 = scmp.eq.s32.totalorder %s75, 0
      %s78 = sadd.s32 %s77, 1
      %s79 = scalar_select %p76, %s77, %s78
      %p82 = pneg %p76
      %p83 = scmp.eq.s32.totalorder %s11, 1
      %p84 = por %p82, %p83
      %p85 = scmp.ne.s32.totalorder %s77, %s80
      %p86 = scmp.eq.s32.totalorder %s11, 0
      %p87 = por %p85, %p86
      %p88 = scmp.ne.s32.totalorder %s77, %s80
      %p89 = scmp.eq.s32.totalorder %s16, 1
      %p90 = por %p88, %p89
      %p91 = scmp.ne.s32.totalorder %s80, %s81
      %p92 = scmp.eq.s32.totalorder %s16, 0
      %p93 = por %p91, %p92
      %p94 = scmp.ne.s32.totalorder %s80, %s81
      %p95 = scmp.eq.s32.totalorder %s17, 1
      %p96 = por %p94, %p95
      %p98 = scmp.ne.s32.totalorder %s81, %s97
      %p99 = scmp.eq.s32.totalorder %s17, 0
      %p100 = por %p98, %p99
      %s101 = ssub.s32 %s18, %s30
      %p102 = scmp.eq.s32.totalorder %s101, 0
      %s104 = sadd.s32 %s103, 1
      %s105 = scalar_select %p102, %s103, %s104
      %p108 = pneg %p102
      %p109 = scmp.eq.s32.totalorder %s11, 1
      %p110 = por %p108, %p109
      %p111 = scmp.ne.s32.totalorder %s103, %s106
      %p112 = scmp.eq.s32.totalorder %s11, 0
      %p113 = por %p111, %p112
      %p114 = scmp.ne.s32.totalorder %s103, %s106
      %p115 = scmp.eq.s32.totalorder %s16, 1
      %p116 = por %p114, %p115
      %p117 = scmp.ne.s32.totalorder %s106, %s107
      %p118 = scmp.eq.s32.totalorder %s16, 0
      %p119 = por %p117, %p118
      %p120 = scmp.ne.s32.totalorder %s106, %s107
      %p121 = scmp.eq.s32.totalorder %s17, 1
      %p122 = por %p120, %p121
      %p124 = scmp.ne.s32.totalorder %s107, %s123
      %p125 = scmp.eq.s32.totalorder %s17, 0
      %p126 = por %p124, %p125
      %s127 = ssub.s32 %s19, %s26
      %s128 = ssub.s32 %s18, %s30
      %s129 = sor.u32 %s127, %s128
      %p130 = scmp.eq.s32.totalorder %s129, 0
      %s132 = sadd.s32 %s131, 1
      %s133 = scalar_select %p130, %s131, %s132
      %p136 = pneg %p130
      %p137 = scmp.eq.s32.totalorder %s11, 1
      %p138 = por %p136, %p137
      %p139 = scmp.ne.s32.totalorder %s131, %s134
      %p140 = scmp.eq.s32.totalorder %s11, 0
      %p141 = por %p139, %p140
      %p142 = scmp.ne.s32.totalorder %s131, %s134
      %p143 = scmp.eq.s32.totalorder %s16, 1
      %p144 = por %p142, %p143
      %p145 = scmp.ne.s32.totalorder %s134, %s135
      %p146 = scmp.eq.s32.totalorder %s16, 0
      %p147 = por %p145, %p146
      %p148 = scmp.ne.s32.totalorder %s134, %s135
      %p149 = scmp.eq.s32.totalorder %s17, 1
      %p150 = por %p148, %p149
      %p152 = scmp.ne.s32.totalorder %s135, %s151
      %p153 = scmp.eq.s32.totalorder %s17, 0
      %p154 = por %p152, %p153
      %p155 = scmp.le.s32.totalorder 1, %s11
      %p156 = scmp.lt.s32.totalorder %s11, 3
      %p157 = pnand %p155, %p156
      %p158 = pneg %p157
      // Predicated region
      $region9: #{kagn_expert_forward.1} parent=5 // pred_check
        _
      $region10: #{kagn_expert_forward.1} parent=5 // pred_check_branch
        %160 = sbr.rel (%p157) target = $region12
      $region11: #{kagn_expert_forward.1} parent=5 // pred_region
        %s161 = ssub.s32 %s11, 1
        // Predicated region
        $region13: #{kagn_expert_forward.1} parent=11 // pred_check
          %p162 = pneg %p44
        $region14: #{kagn_expert_forward.1} parent=11 // pred_check_branch
          %164 = sbr.rel (%p162) target = $region16
        $region15: #{kagn_expert_forward.1} parent=11 // pred_region
          %s166 = ssub.s32 16, 16
          %167 = vsyncadd [#allocation5], %s166
          %s169 = sshll.u32 %s0, 4
          %s170 = int_to_ptr.vmem [resolvable:$true] %s169
          %172 = dma.vmem_to_smem %s170, 16, [#allocation4], [#allocation5]
        $region16: #{kagn_expert_forward.1} parent=11 // pred_fallthru
          _
        // Predicated region
        $region17: #{kagn_expert_forward.1} parent=11 // pred_check
          %p173 = pneg %p65
        $region18: #{kagn_expert_forward.1} parent=11 // pred_check_branch
          %175 = sbr.rel (%p173) target = $region20
        $region19: #{kagn_expert_forward.1} parent=11 // pred_region
          _
        $region20: #{kagn_expert_forward.1} parent=11 // pred_fallthru
          _
      $region12: #{kagn_expert_forward.1} parent=5 // pred_fallthru
        _
      %p176 = scmp.lt.s32.totalorder %s11, 2
      // Predicated region
      $region21: #{kagn_expert_forward.1} parent=5 // pred_check
        %p177 = pneg %p176
      $region22: #{kagn_expert_forward.1} parent=5 // pred_check_branch
        %179 = sbr.rel (%p177) target = $region24
      $region23: #{kagn_expert_forward.1} parent=5 // pred_region
        // Predicated region
        $region25: #{kagn_expert_forward.1} parent=23 // pred_check
          %p180 = pneg %p87
        $region26: #{kagn_expert_forward.1} parent=23 // pred_check_branch
          %182 = sbr.rel (%p180) target = $region28
        $region27: #{kagn_expert_forward.1} parent=23 // pred_region
          %s183 = sand.u32 %s77, 1
          %s184 = sand.u32 %s77, 1
          %s185 = smul.addr %s184, 8
          %s186 = scalar_lea.vmem [#allocation6], %s185
          %s187 = smul.u32 2, %s19
          %s188 = smul.addr %s18, 2
          %s189 = smul.addr %s187, 4
          %s190 = sadd.s32 %s188, %s189
          %s191 = smul.addr %s190, 2
          %s192 = scalar_lea.vmem %s2, %s191
          // Predicated region
          $region29: #{kagn_expert_forward.1} parent=27 // pred_check
            _
          $region30: #{kagn_expert_forward.1} parent=27 // pred_check_branch
            %194 = sbr.rel (0) target = $region32
          $region31: #{kagn_expert_forward.1} parent=27 // pred_region
            // Predicated region
            $region33: #{kagn_expert_forward.1} parent=31 // pred_check
              _
            $region34: #{kagn_expert_forward.1} parent=31 // pred_check_branch
              %196 = sbr.rel target = $region36
            $region35: #{kagn_expert_forward.1} parent=31 // pred_region
              // Predicated region
              $region48: #{kagn_expert_forward.1} parent=35 // pred_check
                _
              $region49: #{kagn_expert_forward.1} parent=35 // pred_check_branch
                %214 = sbr.rel (0) target = $region51
              $region50: #{kagn_expert_forward.1} parent=35 // pred_region
                loop: start=0, step=1, limit=1
                $region52: #{kagn_expert_forward.1} parent=50 // loop_pre_header
                  _
                $region53: #{kagn_expert_forward.1} parent=50 // loop_header
                  %s216 = sphi 0, %s220
                  %p217 = scmp.ge.s32.totalorder %s216, 1
                  %s221 = sphi %s192, %s192
                  %s222 = sphi %s186, %s186
                $region54: #{kagn_expert_forward.1} parent=50 // loop_header_branch
                  %219 = sbr.rel (%p217) target = $region58
                $region55: #{kagn_expert_forward.1} parent=50 // loop_body
                  _
                $region56: #{kagn_expert_forward.1} parent=50 // loop_footer
                  %s220 = sadd.s32 1, %s216
                $region57: #{kagn_expert_forward.1} parent=50 // loop_footer_branch
                  %215 = sbr.rel target = $region53
                $region58: #{kagn_expert_forward.1} parent=50 // loop_exit
                  _
                %s224 = ssub.s32 16, 1
                loop: start=0, step=1, limit=1
                $region59: #{kagn_expert_forward.1} parent=50 // loop_pre_header
                  _
                $region60: #{kagn_expert_forward.1} parent=50 // loop_header
                  %s226 = sphi 0, %s230
                  %p227 = scmp.ge.s32.totalorder %s226, 1
                  %s231 = sphi %s192, %s192
                  %s232 = sphi %s186, %s186
                $region61: #{kagn_expert_forward.1} parent=50 // loop_header_branch
                  %229 = sbr.rel (%p227) target = $region65
                $region62: #{kagn_expert_forward.1} parent=50 // loop_body
                  %v233 = vld [vmem:[%s231] sm:%s224]
                  %234 = vst [vmem:[%s232] sm:%s224] %v233
                  %v235 = vld [vmem:[%s231 + $0x8] sm:%s224]
                  %236 = vst [vmem:[%s232 + $0x4] sm:%s224] %v235
                $region63: #{kagn_expert_forward.1} parent=50 // loop_footer
                  %s230 = sadd.s32 1, %s226
                $region64: #{kagn_expert_forward.1} parent=50 // loop_footer_branch
                  %225 = sbr.rel target = $region60
                $region65: #{kagn_expert_forward.1} parent=50 // loop_exit
                  _
              $region51: #{kagn_expert_forward.1} parent=35 // pred_fallthru
                _
            $region36: #{kagn_expert_forward.1} parent=31 // pred_fallthru
              _
            // Predicated region
            $region37: #{kagn_expert_forward.1} parent=31 // pred_check
              _
            $region38: #{kagn_expert_forward.1} parent=31 // pred_check_branch
              %198 = sbr.rel (0) target = $region40
            $region39: #{kagn_expert_forward.1} parent=31 // pred_region
              %s200 = ssub.s32 16, 1
              loop: start=0, step=1, limit=1
              $region41: #{kagn_expert_forward.1} parent=39 // loop_pre_header
                _
              $region42: #{kagn_expert_forward.1} parent=39 // loop_header
                %s202 = sphi 0, %s206
                %p203 = scmp.ge.s32.totalorder %s202, 1
                %s207 = sphi %s192, %s192
                %s208 = sphi %s186, %s186
              $region43: #{kagn_expert_forward.1} parent=39 // loop_header_branch
                %205 = sbr.rel (%p203) target = $region47
              $region44: #{kagn_expert_forward.1} parent=39 // loop_body
                %v209 = vld [vmem:[%s207] sm:%s200]
                %210 = vst [vmem:[%s208] sm:%s200] %v209
                %v211 = vld [vmem:[%s207 + $0x8] sm:%s200]
                %212 = vst [vmem:[%s208 + $0x4] sm:%s200] %v211
              $region45: #{kagn_expert_forward.1} parent=39 // loop_footer
                %s206 = sadd.s32 1, %s202
              $region46: #{kagn_expert_forward.1} parent=39 // loop_footer_branch
                %201 = sbr.rel target = $region42
              $region47: #{kagn_expert_forward.1} parent=39 // loop_exit
                _
            $region40: #{kagn_expert_forward.1} parent=31 // pred_fallthru
              _
          $region32: #{kagn_expert_forward.1} parent=27 // pred_fallthru
            _
          %237 = vnop
        $region28: #{kagn_expert_forward.1} parent=23 // pred_fallthru
          _
        // Predicated region
        $region66: #{kagn_expert_forward.1} parent=23 // pred_check
          %p238 = pneg %p113
        $region67: #{kagn_expert_forward.1} parent=23 // pred_check_branch
          %240 = sbr.rel (%p238) target = $region69
        $region68: #{kagn_expert_forward.1} parent=23 // pred_region
          %p241 = scmp.lt.s32.totalorder %s18, 1
          %s242 = scalar_select %p241, %s18, 1
          %s243 = smul.addr %s242, 2
          %s244 = scalar_lea.vmem %s3, %s243
        $region69: #{kagn_expert_forward.1} parent=23 // pred_fallthru
          _
      $region24: #{kagn_expert_forward.1} parent=5 // pred_fallthru
        _
      %p245 = scmp.le.s32.totalorder 1, %s11
      %p246 = scmp.lt.s32.totalorder %s11, 3
      %p247 = pnand %p245, %p246
      %p248 = pneg %p247
      // Predicated region
      $region70: #{kagn_expert_forward.1} parent=5 // pred_check
        _
      $region71: #{kagn_expert_forward.1} parent=5 // pred_check_branch
        %250 = sbr.rel (%p247) target = $region73
      $region72: #{kagn_expert_forward.1} parent=5 // pred_region
        %s251 = ssub.s32 %s11, 1
        // Predicated region
        $region74: #{kagn_expert_forward.1} parent=72 // pred_check
          %p252 = pneg %p44
        $region75: #{kagn_expert_forward.1} parent=72 // pred_check_branch
          %254 = sbr.rel (%p252) target = $region77
        $region76: #{kagn_expert_forward.1} parent=72 // pred_region
          %255 = dma.done [#allocation5], 16
        $region77: #{kagn_expert_forward.1} parent=72 // pred_fallthru
          _
        %s256 = sand.u32 %s80, 1
        %s257 = sand.u32 %s80, 1
        %s258 = smul.addr %s257, 8
        %s259 = scalar_lea.vmem [#allocation6], %s258
        // Predicated region
        $region78: #{kagn_expert_forward.1} parent=72 // pred_check
          %p260 = pneg %p93
        $region79: #{kagn_expert_forward.1} parent=72 // pred_check_branch
          %262 = sbr.rel (%p260) target = $region81
        $region80: #{kagn_expert_forward.1} parent=72 // pred_region
          _
        $region81: #{kagn_expert_forward.1} parent=72 // pred_fallthru
          _
        %263 = sfence
        %p264 = pneg %p44
        %p265 = pneg %p41
        %p266 = pneg %p65
        %p267 = pneg %p62
        %s268 = sand.u32 %s80, 1
        %s269 = sand.u32 %s80, 1
        %s270 = smul.addr %s269, 8
        %s271 = scalar_lea.vmem [#allocation6], %s270
        %p272 = pneg %p93
        %p273 = pneg %p90
        %p274 = scmp.lt.s32.totalorder %s20, 1
        %s275 = scalar_select %p274, %s20, 1
        %s276 = smul.addr %s275, 2
        %s277 = scalar_lea.vmem %s3, %s276
        %p278 = pneg %p119
        %p279 = pneg %p116
        %p280 = pneg %p147
        %p281 = pneg %p144
        %s282 = sand.u32 %s134, 1
        %s283 = sand.u32 %s134, 1
        %s284 = smul.addr %s283, 16
        %s285 = scalar_lea.vmem [#allocation7], %s284
        %s286 = smul.u32 2, %s21
        %p287 = scmp.lt.s32.totalorder %s20, 1
        %s288 = scalar_select %p287, %s20, 1
        %s289 = smul.addr %s288, 2
        %s290 = scalar_lea.vmem %s3, %s289
        %s291 = smul.u32 2, %s21
        %v293 = vld [vmem:[%s259] sm:$0xf]
        %v294 = vld [vmem:[%s259 + $0x4] sm:$0xf]
        %v295 = vtanh.pop %v293
        %v296 = vtanh.pop %v294
        %297 = vst [vmem:[#allocation2] sm:$0x3] 0.7310586
        %298 = vst [vmem:[#allocation2 + $0x8] sm:$0x3] 0.7310586
        %299 = vst [vmem:[#allocation2 + $0x10] sm:$0x3] 0.7310586
        %300 = vst [vmem:[#allocation2 + $0x18] sm:$0x3] 0.7310586
        %v301 = vsub.f32 0.0, %v295
        %v302 = vsub.f32 0.0, %v296
        %v303 = vmul.f32 %v301, 1.442695
        %v304 = vpow.pop %v303
        %v305 = vmul.f32 %v302, 1.442695
        %v306 = vpow.pop %v305
        %v307 = vadd.f32 %v304, 1.0
        %v308 = vadd.f32 %v306, 1.0
        %v309 = vrcp.pop %v307
        %v310 = vrcp.pop %v308
        %v311 = vmul.f32 %v295, %v309
        %v312 = vmul.f32 %v296, %v310
        %v314 = vcombine.low %v311, %v311
        %v316 = vunpack.c.l.s4 1983009808
        %v317 = vunpack.c.0.s8 %v316
        %v318 = vlaneseq
        %v319 = vshrl.u32 %v318, 7
        %v320 = vsub.s32 %v317, %v319
        %v321 = vrot.slane %v314, %v320
        %v322 = vcombine.high %v321, %v321
        %325 = vst [vmem:[#allocation2] sm:$0xc] %v321
        %326 = vst [vmem:[#allocation2 + $0x8] sm:$0xc] %v322
        %v328 = vcombine.low %v312, %v312
        %v330 = vunpack.c.l.s4 1983009808
        %v331 = vunpack.c.0.s8 %v330
        %v332 = vlaneseq
        %v333 = vshrl.u32 %v332, 7
        %v334 = vsub.s32 %v331, %v333
        %v335 = vrot.slane %v328, %v334
        %v336 = vcombine.high %v335, %v335
        %339 = vst [vmem:[#allocation2 + $0x10] sm:$0xc] %v335
        %340 = vst [vmem:[#allocation2 + $0x18] sm:$0xc] %v336
        %v341 = vmul.f32 %v295, %v295
        %v342 = vmul.f32 %v296, %v296
        %s343 = sld [smem:[#allocation4 + $0x1]]
        %s344 = smul.f32 %s343, 2.25
        %v345 = vstv %s344
        %v346 = vsub.f32 %v341, %v345
        %v347 = vsub.f32 %v342, %v345
        %v348 = vsub.f32 0.0, %v346
        %v349 = vsub.f32 0.0, %v347
        %v350 = vmul.f32 %v348, 1.442695
        %v351 = vpow.pop %v350
        %v352 = vmul.f32 %v349, 1.442695
        %v353 = vpow.pop %v352
        %v354 = vadd.f32 %v351, 1.0
        %v355 = vadd.f32 %v353, 1.0
        %v356 = vrcp.pop %v354
        %v357 = vrcp.pop %v355
        %v358 = vmul.f32 %v346, %v356
        %v359 = vmul.f32 %v347, %v357
        %v362 = vunpack.c.l.s4 1983009808
        %v363 = vunpack.c.0.s8 %v362
        %v364 = vlaneseq
        %v365 = vshrl.u32 %v364, 7
        %v366 = vsub.s32 %v363, %v365
        %v367 = vrot.slane %v358, %v366
        %v368 = vcombine.low %v367, %v367
        %371 = vst [vmem:[#allocation2] sm:$0x30] %v368
        %372 = vst [vmem:[#allocation2 + $0x8] sm:$0x30] %v367
        %v375 = vunpack.c.l.s4 1983009808
        %v376 = vunpack.c.0.s8 %v375
        %v377 = vlaneseq
        %v378 = vshrl.u32 %v377, 7
        %v379 = vsub.s32 %v376, %v378
        %v380 = vrot.slane %v359, %v379
        %v381 = vcombine.low %v380, %v380
        %384 = vst [vmem:[#allocation2 + $0x10] sm:$0x30] %v381
        %385 = vst [vmem:[#allocation2 + $0x18] sm:$0x30] %v380
        %v386 = vmul.f32 %v295, %v346
        %v387 = vmul.f32 %v296, %v347
        %s388 = sld [smem:[#allocation4 + $0x2]]
        %s389 = smul.f32 %s388, 33.333332
        %v390 = vstv %s389
        %v391 = vmul.f32 %v390, %v295
        %v392 = vmul.f32 %v390, %v296
        %v393 = vsub.f32 %v386, %v391
        %v394 = vsub.f32 %v387, %v392
        %v395 = vsub.f32 0.0, %v393
        %v396 = vsub.f32 0.0, %v394
        %v397 = vmul.f32 %v395, 1.442695
        %v398 = vpow.pop %v397
        %v399 = vmul.f32 %v396, 1.442695
        %v400 = vpow.pop %v399
        %v401 = vadd.f32 %v398, 1.0
        %v402 = vadd.f32 %v400, 1.0
        %v403 = vrcp.pop %v401
        %v404 = vrcp.pop %v402
        %v405 = vmul.f32 %v393, %v403
        %v406 = vmul.f32 %v394, %v404
        %v408 = vcombine.low %v405, %v405
        %v410 = vunpack.c.l.s4 1983009808
        %v411 = vunpack.c.0.s8 %v410
        %v412 = vlaneseq
        %v413 = vshrl.u32 %v412, 7
        %v414 = vsub.s32 %v411, %v413
        %v415 = vrot.slane %v408, %v414
        %v416 = vcombine.low %v415, %v415
        %419 = vst [vmem:[#allocation2] sm:$0xc0] %v416
        %420 = vst [vmem:[#allocation2 + $0x8] sm:$0xc0] %v415
        %v422 = vcombine.low %v406, %v406
        %v424 = vunpack.c.l.s4 1983009808
        %v425 = vunpack.c.0.s8 %v424
        %v426 = vlaneseq
        %v427 = vshrl.u32 %v426, 7
        %v428 = vsub.s32 %v425, %v427
        %v429 = vrot.slane %v422, %v428
        %v430 = vcombine.low %v429, %v429
        %433 = vst [vmem:[#allocation2 + $0x10] sm:$0xc0] %v430
        %434 = vst [vmem:[#allocation2 + $0x18] sm:$0xc0] %v429
        %v435 = vld [vmem:[#allocation2] sm:$0xff]
        %v436 = vld [vmem:[#allocation2 + $0x8] sm:$0xff]
        %v437 = vld [vmem:[#allocation2 + $0x10] sm:$0xff]
        %v438 = vld [vmem:[#allocation2 + $0x18] sm:$0xff]
        %v439 = vld [vmem:[%s1] sm:$0xff]
        %v440 = vld [vmem:[%s1 + $0x8] sm:$0xff]
        %v441 = vld [vmem:[%s1 + $0x10] sm:$0x1]
        %v442 = vld [vmem:[%s1 + $0x18] sm:$0x1]
        %443 = vrot.lane.b32.xlu0 %v435, 17
        %v444 = vpop.permute.xlu0 %443
        %445 = vrot.lane.b32.xlu0 %v437, 17
        %v446 = vpop.permute.xlu0 %445
        %447 = vrot.lane.b32.xlu0 %v436, 17
        %v448 = vpop.permute.xlu0 %447
        %449 = vrot.lane.b32.xlu0 %v438, 17
        %v450 = vpop.permute.xlu0 %449
        %v451 = vlaneseq
        %v452 = vand.u32 %v451, 127
        %vm453 = vcmp.lt.s32.totalorder %v452, 17
        %v454 = vsel %vm453, %v444, %v448
        %v455 = vsel %vm453, %v446, %v450
        %v456 = vsel %vm453, %v448, %v444
        %v457 = vsel %vm453, %v450, %v446
        %v458 = vlaneseq
        %v459 = vshrl.u32 %v458, 7
        %v460 = vsub.s32 0, %v459
        %v461 = vrot.slane %v439, %v460
        %v462 = vlaneseq
        %v463 = vshrl.u32 %v462, 7
        %v464 = vsub.s32 0, %v463
        %v465 = vrot.slane %v440, %v464
        %v466 = vmul.f32 %v456, %v461
        %v467 = vmul.f32 %v454, %v465
        %v468 = vmul.f32 %v457, %v461
        %v469 = vmul.f32 %v455, %v465
        %v470 = vpack.c.bf16 %v468, %v466
        %v471 = vpack.c.bf16 %v469, %v467
        %v474 = vunpack.c.l.b16 %v470
        %v475 = vunpack.c.l.b16 %v471
        %v476 = vpack.c.b16 %v475, %v474
        %478 = vst [vmem:[#allocation3] sm:$0xff] %v476
        %v479 = vunpack.c.h.b16 %v470
        %v480 = vunpack.c.h.b16 %v471
        %v481 = vpack.c.b16 %v480, %v479
        %483 = vst [vmem:[#allocation3 + $0x8] sm:$0xff] %v481
        %484 = vrot.lane.b32.xlu0 %v435, 16
        %v485 = vpop.permute.xlu0 %484
        %486 = vrot.lane.b32.xlu0 %v437, 16
        %v487 = vpop.permute.xlu0 %486
        %488 = vrot.lane.b32.xlu0 %v436, 16
        %v489 = vpop.permute.xlu0 %488
        %490 = vrot.lane.b32.xlu0 %v438, 16
        %v491 = vpop.permute.xlu0 %490
        %vm492 = vcmp.lt.s32.totalorder %v452, 16
        %v493 = vsel %vm492, %v485, %v489
        %v494 = vsel %vm492, %v487, %v491
        %v495 = vsel %vm492, %v489, %v485
        %v496 = vsel %vm492, %v491, %v487
        %v497 = vlaneseq
        %v498 = vshrl.u32 %v497, 7
        %v499 = vsub.s32 1, %v498
        %v500 = vrot.slane %v439, %v499
        %v501 = vlaneseq
        %v502 = vshrl.u32 %v501, 7
        %v503 = vsub.s32 1, %v502
        %v504 = vrot.slane %v440, %v503
        %v505 = vmul.f32 %v495, %v500
        %v506 = vmul.f32 %v493, %v504
        %v507 = vmul.f32 %v496, %v500
        %v508 = vmul.f32 %v494, %v504
        %v509 = vpack.c.bf16 %v507, %v505
        %v510 = vpack.c.bf16 %v508, %v506
        %v513 = vunpack.c.l.b16 %v509
        %v514 = vunpack.c.l.b16 %v510
        %v515 = vpack.c.b16 %v514, %v513
        %517 = vst [vmem:[#allocation3 + $0x10] sm:$0xff] %v515
        %v518 = vunpack.c.h.b16 %v509
        %v519 = vunpack.c.h.b16 %v510
        %v520 = vpack.c.b16 %v519, %v518
        %522 = vst [vmem:[#allocation3 + $0x18] sm:$0xff] %v520
        %523 = vrot.lane.b32.xlu0 %v435, 15
        %v524 = vpop.permute.xlu0 %523
        %525 = vrot.lane.b32.xlu0 %v437, 15
        %v526 = vpop.permute.xlu0 %525
        %527 = vrot.lane.b32.xlu0 %v436, 15
        %v528 = vpop.permute.xlu0 %527
        %529 = vrot.lane.b32.xlu0 %v438, 15
        %v530 = vpop.permute.xlu0 %529
        %vm531 = vcmp.lt.s32.totalorder %v452, 15
        %v532 = vsel %vm531, %v524, %v528
        %v533 = vsel %vm531, %v526, %v530
        %v534 = vsel %vm531, %v528, %v524
        %v535 = vsel %vm531, %v530, %v526
        %v536 = vlaneseq
        %v537 = vshrl.u32 %v536, 7
        %v538 = vsub.s32 2, %v537
        %v539 = vrot.slane %v439, %v538
        %v540 = vlaneseq
        %v541 = vshrl.u32 %v540, 7
        %v542 = vsub.s32 2, %v541
        %v543 = vrot.slane %v440, %v542
        %v544 = vmul.f32 %v534, %v539
        %v545 = vmul.f32 %v532, %v543
        %v546 = vmul.f32 %v535, %v539
        %v547 = vmul.f32 %v533, %v543
        %v548 = vpack.c.bf16 %v546, %v544
        %v549 = vpack.c.bf16 %v547, %v545
        %v552 = vunpack.c.l.b16 %v548
        %v553 = vunpack.c.l.b16 %v549
        %v554 = vpack.c.b16 %v553, %v552
        %556 = vst [vmem:[#allocation3 + $0x20] sm:$0xff] %v554
        %v557 = vunpack.c.h.b16 %v548
        %v558 = vunpack.c.h.b16 %v549
        %v559 = vpack.c.b16 %v558, %v557
        %561 = vst [vmem:[#allocation3 + $0x28] sm:$0xff] %v559
        %562 = vrot.lane.b32.xlu0 %v435, 1
        %v563 = vpop.permute.xlu0 %562
        %564 = vrot.lane.b32.xlu0 %v437, 1
        %v565 = vpop.permute.xlu0 %564
        %566 = vrot.lane.b32.xlu0 %v436, 1
        %v567 = vpop.permute.xlu0 %566
        %568 = vrot.lane.b32.xlu0 %v438, 1
        %v569 = vpop.permute.xlu0 %568
        %vm570 = vcmp.lt.s32.totalorder %v452, 1
        %v571 = vsel %vm570, %v563, %v567
        %v572 = vsel %vm570, %v565, %v569
        %v573 = vsel %vm570, %v567, %v563
        %v574 = vsel %vm570, %v569, %v565
        %v575 = vlaneseq
        %v576 = vshrl.u32 %v575, 7
        %v577 = vsub.s32 3, %v576
        %v578 = vrot.slane %v439, %v577
        %v579 = vlaneseq
        %v580 = vshrl.u32 %v579, 7
        %v581 = vsub.s32 3, %v580
        %v582 = vrot.slane %v440, %v581
        %v583 = vmul.f32 %v573, %v578
        %v584 = vmul.f32 %v571, %v582
        %v585 = vmul.f32 %v574, %v578
        %v586 = vmul.f32 %v572, %v582
        %v587 = vpack.c.bf16 %v585, %v583
        %v588 = vpack.c.bf16 %v586, %v584
        %v591 = vunpack.c.l.b16 %v587
        %v592 = vunpack.c.l.b16 %v588
        %v593 = vpack.c.b16 %v592, %v591
        %595 = vst [vmem:[#allocation3 + $0x30] sm:$0xff] %v593
        %v596 = vunpack.c.h.b16 %v587
        %v597 = vunpack.c.h.b16 %v588
        %v598 = vpack.c.b16 %v597, %v596
        %600 = vst [vmem:[#allocation3 + $0x38] sm:$0xff] %v598
        %v601 = vpack.c.bf16 %v437, %v435
        %v602 = vpack.c.bf16 %v438, %v436
        %v605 = vunpack.c.l.b16 %v601
        %v606 = vunpack.c.l.b16 %v602
        %v607 = vpack.c.b16 %v606, %v605
        %609 = vst [vmem:[#allocation3 + $0x40] sm:$0xff] %v607
        %v610 = vunpack.c.h.b16 %v601
        %v611 = vunpack.c.h.b16 %v602
        %v612 = vpack.c.b16 %v611, %v610
        %614 = vst [vmem:[#allocation3 + $0x48] sm:$0xff] %v612
        %615 = vrot.lane.b32.xlu0 %v435, 127
        %v616 = vpop.permute.xlu0 %615
        %617 = vrot.lane.b32.xlu0 %v437, 127
        %v618 = vpop.permute.xlu0 %617
        %619 = vrot.lane.b32.xlu0 %v436, 127
        %v620 = vpop.permute.xlu0 %619
        %621 = vrot.lane.b32.xlu0 %v438, 127
        %v622 = vpop.permute.xlu0 %621
        %vm623 = vcmp.lt.s32.totalorder %v452, 127
        %v624 = vsel %vm623, %v616, %v620
        %v625 = vsel %vm623, %v618, %v622
        %v626 = vsel %vm623, %v620, %v616
        %v627 = vsel %vm623, %v622, %v618
        %v628 = vlaneseq
        %v629 = vshrl.u32 %v628, 7
        %v630 = vsub.s32 5, %v629
        %v631 = vrot.slane %v439, %v630
        %v632 = vlaneseq
        %v633 = vshrl.u32 %v632, 7
        %v634 = vsub.s32 5, %v633
        %v635 = vrot.slane %v440, %v634
        %v636 = vmul.f32 %v624, %v631
        %v637 = vmul.f32 %v626, %v635
        %v638 = vmul.f32 %v625, %v631
        %v639 = vmul.f32 %v627, %v635
        %v640 = vpack.c.bf16 %v638, %v636
        %v641 = vpack.c.bf16 %v639, %v637
        %v644 = vunpack.c.l.b16 %v640
        %v645 = vunpack.c.l.b16 %v641
        %v646 = vpack.c.b16 %v645, %v644
        %648 = vst [vmem:[#allocation3 + $0x50] sm:$0xff] %v646
        %v649 = vunpack.c.h.b16 %v640
        %v650 = vunpack.c.h.b16 %v641
        %v651 = vpack.c.b16 %v650, %v649
        %653 = vst [vmem:[#allocation3 + $0x58] sm:$0xff] %v651
        %654 = vrot.lane.b32.xlu0 %v435, 113
        %v655 = vpop.permute.xlu0 %654
        %656 = vrot.lane.b32.xlu0 %v437, 113
        %v657 = vpop.permute.xlu0 %656
        %658 = vrot.lane.b32.xlu0 %v436, 113
        %v659 = vpop.permute.xlu0 %658
        %660 = vrot.lane.b32.xlu0 %v438, 113
        %v661 = vpop.permute.xlu0 %660
        %vm662 = vcmp.lt.s32.totalorder %v452, 113
        %v663 = vsel %vm662, %v655, %v659
        %v664 = vsel %vm662, %v657, %v661
        %v665 = vsel %vm662, %v659, %v655
        %v666 = vsel %vm662, %v661, %v657
        %v667 = vlaneseq
        %v668 = vshrl.u32 %v667, 7
        %v669 = vsub.s32 6, %v668
        %v670 = vrot.slane %v439, %v669
        %v671 = vlaneseq
        %v672 = vshrl.u32 %v671, 7
        %v673 = vsub.s32 6, %v672
        %v674 = vrot.slane %v440, %v673
        %v675 = vmul.f32 %v663, %v670
        %v676 = vmul.f32 %v665, %v674
        %v677 = vmul.f32 %v664, %v670
        %v678 = vmul.f32 %v666, %v674
        %v679 = vpack.c.bf16 %v677, %v675
        %v680 = vpack.c.bf16 %v678, %v676
        %v683 = vunpack.c.l.b16 %v679
        %v684 = vunpack.c.l.b16 %v680
        %v685 = vpack.c.b16 %v684, %v683
        %687 = vst [vmem:[#allocation3 + $0x60] sm:$0xff] %v685
        %v688 = vunpack.c.h.b16 %v679
        %v689 = vunpack.c.h.b16 %v680
        %v690 = vpack.c.b16 %v689, %v688
        %692 = vst [vmem:[#allocation3 + $0x68] sm:$0xff] %v690
        %693 = vrot.lane.b32.xlu0 %v435, 112
        %v694 = vpop.permute.xlu0 %693
        %695 = vrot.lane.b32.xlu0 %v437, 112
        %v696 = vpop.permute.xlu0 %695
        %697 = vrot.lane.b32.xlu0 %v436, 112
        %v698 = vpop.permute.xlu0 %697
        %699 = vrot.lane.b32.xlu0 %v438, 112
        %v700 = vpop.permute.xlu0 %699
        %vm701 = vcmp.lt.s32.totalorder %v452, 112
        %v702 = vsel %vm701, %v694, %v698
        %v703 = vsel %vm701, %v696, %v700
        %v704 = vsel %vm701, %v698, %v694
        %v705 = vsel %vm701, %v700, %v696
        %v706 = vlaneseq
        %v707 = vshrl.u32 %v706, 7
        %v708 = vsub.s32 7, %v707
        %v709 = vrot.slane %v439, %v708
        %v710 = vlaneseq
        %v711 = vshrl.u32 %v710, 7
        %v712 = vsub.s32 7, %v711
        %v713 = vrot.slane %v440, %v712
        %v714 = vmul.f32 %v702, %v709
        %v715 = vmul.f32 %v704, %v713
        %v716 = vmul.f32 %v703, %v709
        %v717 = vmul.f32 %v705, %v713
        %v718 = vpack.c.bf16 %v716, %v714
        %v719 = vpack.c.bf16 %v717, %v715
        %v722 = vunpack.c.l.b16 %v718
        %v723 = vunpack.c.l.b16 %v719
        %v724 = vpack.c.b16 %v723, %v722
        %726 = vst [vmem:[#allocation3 + $0x70] sm:$0xff] %v724
        %v727 = vunpack.c.h.b16 %v718
        %v728 = vunpack.c.h.b16 %v719
        %v729 = vpack.c.b16 %v728, %v727
        %731 = vst [vmem:[#allocation3 + $0x78] sm:$0xff] %v729
        %732 = vrot.lane.b32.xlu0 %v435, 111
        %v733 = vpop.permute.xlu0 %732
        %734 = vrot.lane.b32.xlu0 %v437, 111
        %v735 = vpop.permute.xlu0 %734
        %736 = vrot.lane.b32.xlu0 %v436, 111
        %v737 = vpop.permute.xlu0 %736
        %738 = vrot.lane.b32.xlu0 %v438, 111
        %v739 = vpop.permute.xlu0 %738
        %vm740 = vcmp.lt.s32.totalorder %v452, 111
        %v741 = vsel %vm740, %v733, %v737
        %v742 = vsel %vm740, %v735, %v739
        %v743 = vsel %vm740, %v737, %v733
        %v744 = vsel %vm740, %v739, %v735
        %v745 = vlaneseq
        %v746 = vshrl.u32 %v745, 7
        %v747 = vsub.s32 0, %v746
        %v748 = vrot.slane %v441, %v747
        %v749 = vlaneseq
        %v750 = vshrl.u32 %v749, 7
        %v751 = vsub.s32 0, %v750
        %v752 = vrot.slane %v442, %v751
        %v753 = vmul.f32 %v741, %v748
        %v754 = vmul.f32 %v743, %v752
        %v755 = vmul.f32 %v742, %v748
        %v756 = vmul.f32 %v744, %v752
        %v757 = vpack.c.bf16 %v755, %v753
        %v758 = vpack.c.bf16 %v756, %v754
        %v761 = vunpack.c.l.b16 %v757
        %v762 = vunpack.c.l.b16 %v758
        %v763 = vpack.c.b16 %v762, %v761
        %765 = vst [vmem:[#allocation3 + $0x80] sm:$0xff] %v763
        %v766 = vunpack.c.h.b16 %v757
        %v767 = vunpack.c.h.b16 %v758
        %v768 = vpack.c.b16 %v767, %v766
        %770 = vst [vmem:[#allocation3 + $0x88] sm:$0xff] %v768
        %v771 = vld [vmem:[%s290] sm:$0x3]
        %v772 = vld [vmem:[#allocation3] sm:$0xff]
        %v773 = vld [vmem:[#allocation3 + $0x8] sm:$0xff]
        %v774 = vld [vmem:[#allocation3 + $0x10] sm:$0xff]
        %v775 = vld [vmem:[#allocation3 + $0x18] sm:$0xff]
        %v776 = vld [vmem:[#allocation3 + $0x20] sm:$0xff]
        %v777 = vld [vmem:[#allocation3 + $0x28] sm:$0xff]
        %v778 = vld [vmem:[#allocation3 + $0x30] sm:$0xff]
        %v779 = vld [vmem:[#allocation3 + $0x38] sm:$0xff]
        %v780 = vld [vmem:[#allocation3 + $0x40] sm:$0xff]
        %v781 = vld [vmem:[#allocation3 + $0x48] sm:$0xff]
        %v782 = vld [vmem:[#allocation3 + $0x50] sm:$0xff]
        %v783 = vld [vmem:[#allocation3 + $0x58] sm:$0xff]
        %v784 = vld [vmem:[#allocation3 + $0x60] sm:$0xff]
        %v785 = vld [vmem:[#allocation3 + $0x68] sm:$0xff]
        %v786 = vld [vmem:[#allocation3 + $0x70] sm:$0xff]
        %v787 = vld [vmem:[#allocation3 + $0x78] sm:$0xff]
        %v788 = vld [vmem:[#allocation3 + $0x80] sm:$0xff]
        %v789 = vld [vmem:[#allocation3 + $0x88] sm:$0xff]
        %v808 = vunpack.c.l.b16 %v772
        %v809 = vunpack.c.h.b16 %v772
        %v810 = vunpack.c.l.b16 %v773
        %v811 = vunpack.c.h.b16 %v773
        %v812 = vunpack.c.l.b16 %v774
        %v813 = vunpack.c.h.b16 %v774
        %v814 = vunpack.c.l.b16 %v775
        %v815 = vunpack.c.h.b16 %v775
        %v816 = vunpack.c.l.b16 %v776
        %v817 = vunpack.c.h.b16 %v776
        %v818 = vunpack.c.l.b16 %v777
        %v819 = vunpack.c.h.b16 %v777
        %v820 = vunpack.c.l.b16 %v778
        %v821 = vunpack.c.h.b16 %v778
        %v822 = vunpack.c.l.b16 %v779
        %v823 = vunpack.c.h.b16 %v779
        %v824 = vunpack.c.l.b16 %v780
        %v825 = vunpack.c.h.b16 %v780
        %v826 = vunpack.c.l.b16 %v781
        %v827 = vunpack.c.h.b16 %v781
        %v828 = vunpack.c.l.b16 %v782
        %v829 = vunpack.c.h.b16 %v782
        %v830 = vunpack.c.l.b16 %v783
        %v831 = vunpack.c.h.b16 %v783
        %v832 = vunpack.c.l.b16 %v784
        %v833 = vunpack.c.h.b16 %v784
        %v834 = vunpack.c.l.b16 %v785
        %v835 = vunpack.c.h.b16 %v785
        %v836 = vunpack.c.l.b16 %v786
        %v837 = vunpack.c.h.b16 %v786
        %v838 = vunpack.c.l.b16 %v787
        %v839 = vunpack.c.h.b16 %v787
        %v840 = vunpack.c.l.b16 %v788
        %v841 = vunpack.c.h.b16 %v788
        %v842 = vunpack.c.l.b16 %v789
        %v843 = vunpack.c.h.b16 %v789
        %v844 = vpack.c.b16 %v812, %v808
        %v845 = vpack.c.b16 %v813, %v809
        %v846 = vpack.c.b16 %v814, %v810
        %v847 = vpack.c.b16 %v815, %v811
        %v848 = vpack.c.b16 %v820, %v816
        %v849 = vpack.c.b16 %v821, %v817
        %v850 = vpack.c.b16 %v822, %v818
        %v851 = vpack.c.b16 %v823, %v819
        %v852 = vpack.c.b16 %v828, %v824
        %v853 = vpack.c.b16 %v829, %v825
        %v854 = vpack.c.b16 %v830, %v826
        %v855 = vpack.c.b16 %v831, %v827
        %v856 = vpack.c.b16 %v836, %v832
        %v857 = vpack.c.b16 %v837, %v833
        %v858 = vpack.c.b16 %v838, %v834
        %v859 = vpack.c.b16 %v839, %v835
        %v860 = vpack.c.b16 %v840, %v840
        %v861 = vpack.c.b16 %v841, %v841
        %v862 = vpack.c.b16 %v842, %v842
        %v863 = vpack.c.b16 %v843, %v843
        %vm880 = vcmask 588800
        %v882 = vsel %vm880, %v771, 0
        %vm884 = vcmask 1043456
        %v886 = vsel %vm884, %v860, 0
        %v889 = vsel %vm884, %v861, 0
        %v892 = vsel %vm884, %v862, 0
        %v895 = vsel %vm884, %v863, 0
        %897 = vmatprep.subr.bf16.mxu0 0
        %898 = vmatpush1.bf16.msra.mxu0 0
        %899 = vmatprep.subr.bf16.mxu0 0
        %900 = vmatpush1.bf16.msra.mxu0 0
        %901 = vmatprep.subr.bf16.mxu0 0
        %902 = vmatpush1.bf16.msra.mxu0 0
        %903 = vmatprep.subr.bf16.mxu0 %v889
        %904 = vmatpush1.bf16.msra.mxu0 %v886
        %905 = vmatprep.subr.bf16.mxu0 %v857
        %906 = vmatpush1.bf16.msra.mxu0 %v856
        %907 = vmatprep.subr.bf16.mxu0 %v853
        %908 = vmatpush1.bf16.msra.mxu0 %v852
        %909 = vmatprep.subr.bf16.mxu0 %v849
        %910 = vmatpush1.bf16.msra.mxu0 %v848
        %911 = vmatprep.subr.bf16.mxu0 %v845
        %912 = vmatpush1.bf16.msra.mxu0 %v844
        %913 = vmatprep.subr.bf16.mxu0 0
        %914 = vmatpush2.bf16.msra.mxu0 0
        %915 = vmatprep.subr.bf16.mxu0 0
        %916 = vmatpush2.bf16.msra.mxu0 0
        %917 = vmatprep.subr.bf16.mxu0 0
        %918 = vmatpush2.bf16.msra.mxu0 0
        %919 = vmatprep.subr.bf16.mxu0 0
        %920 = vmatpush2.bf16.msra.mxu0 0
        %921 = vmatprep.subr.bf16.mxu0 0
        %922 = vmatpush2.bf16.msra.mxu0 0
        %923 = vmatprep.subr.bf16.mxu0 0
        %924 = vmatpush2.bf16.msra.mxu0 0
        %925 = vmatprep.subr.bf16.mxu0 0
        %926 = vmatpush2.bf16.msra.mxu0 0
        %927 = vmatprep.subr.bf16.mxu0 0
        %928 = vmatpush2.bf16.msra.mxu0 0
        %929 = vmatprep.mubr.bf16.mxu0 0
        %930 = vmatmul.mubr.bf16.gmra.mxu0 %v882
        %v931 = vpop.f32.mrf.mxu0
        %v932 = vadd.f32 0.0, %v931
        %v933 = vpop.f32.mrf.mxu0
        %v934 = vadd.f32 0.0, %v933
        %v935 = vpop.f32.mrf.mxu0
        %v936 = vpop.f32.mrf.mxu0
        %937 = vdwg.mxu0
        %938 = vmatprep.subr.bf16.mxu0 0
        %939 = vmatpush1.bf16.msra.mxu0 0
        %940 = vmatprep.subr.bf16.mxu0 0
        %941 = vmatpush1.bf16.msra.mxu0 0
        %942 = vmatprep.subr.bf16.mxu0 0
        %943 = vmatpush1.bf16.msra.mxu0 0
        %944 = vmatprep.subr.bf16.mxu0 %v895
        %945 = vmatpush1.bf16.msra.mxu0 %v892
        %946 = vmatprep.subr.bf16.mxu0 %v859
        %947 = vmatpush1.bf16.msra.mxu0 %v858
        %948 = vmatprep.subr.bf16.mxu0 %v855
        %949 = vmatpush1.bf16.msra.mxu0 %v854
        %950 = vmatprep.subr.bf16.mxu0 %v851
        %951 = vmatpush1.bf16.msra.mxu0 %v850
        %952 = vmatprep.subr.bf16.mxu0 %v847
        %953 = vmatpush1.bf16.msra.mxu0 %v846
        %954 = vmatprep.subr.bf16.mxu0 0
        %955 = vmatpush2.bf16.msra.mxu0 0
        %956 = vmatprep.subr.bf16.mxu0 0
        %957 = vmatpush2.bf16.msra.mxu0 0
        %958 = vmatprep.subr.bf16.mxu0 0
        %959 = vmatpush2.bf16.msra.mxu0 0
        %960 = vmatprep.subr.bf16.mxu0 0
        %961 = vmatpush2.bf16.msra.mxu0 0
        %962 = vmatprep.subr.bf16.mxu0 0
        %963 = vmatpush2.bf16.msra.mxu0 0
        %964 = vmatprep.subr.bf16.mxu0 0
        %965 = vmatpush2.bf16.msra.mxu0 0
        %966 = vmatprep.subr.bf16.mxu0 0
        %967 = vmatpush2.bf16.msra.mxu0 0
        %968 = vmatprep.subr.bf16.mxu0 0
        %969 = vmatpush2.bf16.msra.mxu0 0
        %970 = vmatprep.mubr.bf16.mxu0 0
        %971 = vmatmul.mubr.bf16.gmra.mxu0 %v882
        %v972 = vpop.f32.mrf.mxu0
        %v973 = vadd.f32 0.0, %v972
        %v974 = vpop.f32.mrf.mxu0
        %v975 = vadd.f32 0.0, %v974
        %v976 = vpop.f32.mrf.mxu0
        %v977 = vpop.f32.mrf.mxu0
        %978 = vdwg.mxu0
        %v981 = vcombine.low %v932, %v934
        %983 = vst [vmem:[%s285] sm:$0xff] %v981
        %v986 = vcombine.low %v973, %v975
        %s988 = scalar_lea.vmem %s285, 8 [#allocation7]
        %989 = vst [vmem:[%s988] sm:$0xff] %v986
        %s990 = sand.u32 %s134, 1
        %s991 = sand.u32 %s134, 1
        %s992 = smul.addr %s991, 16
        %s993 = scalar_lea.vmem [#allocation7], %s992
        // Predicated region
        $region82: #{kagn_expert_forward.1} parent=72 // pred_check
          %p994 = pneg %p144
        $region83: #{kagn_expert_forward.1} parent=72 // pred_check_branch
          %996 = sbr.rel (%p994) target = $region85
        $region84: #{kagn_expert_forward.1} parent=72 // pred_region
          %s997 = smul.u32 2, %s21
          %s998 = smul.addr %s20, 2
          %s999 = smul.addr %s997, 4
          %s1000 = sadd.s32 %s998, %s999
          %s1001 = smul.addr %s1000, 4
          %s1002 = scalar_lea.vmem %s4, %s1001
          // Predicated region
          $region86: #{kagn_expert_forward.1} parent=84 // pred_check
            _
          $region87: #{kagn_expert_forward.1} parent=84 // pred_check_branch
            %1004 = sbr.rel (0) target = $region89
          $region88: #{kagn_expert_forward.1} parent=84 // pred_region
            // Predicated region
            $region90: #{kagn_expert_forward.1} parent=88 // pred_check
              _
            $region91: #{kagn_expert_forward.1} parent=88 // pred_check_branch
              %1006 = sbr.rel (0) target = $region93
            $region92: #{kagn_expert_forward.1} parent=88 // pred_region
              // Predicated region
              $region105: #{kagn_expert_forward.1} parent=92 // pred_check
                _
              $region106: #{kagn_expert_forward.1} parent=92 // pred_check_branch
                %1024 = sbr.rel (0) target = $region108
              $region107: #{kagn_expert_forward.1} parent=92 // pred_region
                loop: start=0, step=1, limit=1
                $region109: #{kagn_expert_forward.1} parent=107 // loop_pre_header
                  _
                $region110: #{kagn_expert_forward.1} parent=107 // loop_header
                  %s1026 = sphi 0, %s1030
                  %p1027 = scmp.ge.s32.totalorder %s1026, 1
                  %s1031 = sphi %s993, %s993
                  %s1032 = sphi %s1002, %s1002
                $region111: #{kagn_expert_forward.1} parent=107 // loop_header_branch
                  %1029 = sbr.rel (%p1027) target = $region115
                $region112: #{kagn_expert_forward.1} parent=107 // loop_body
                  %v1033 = vld [vmem:[%s1031] sm:$0xff]
                  %1034 = vst [vmem:[%s1032] sm:$0xff] %v1033
                  %v1035 = vld [vmem:[%s1031 + $0x8] sm:$0xff]
                  %1036 = vst [vmem:[%s1032 + $0x10] sm:$0xff] %v1035
                $region113: #{kagn_expert_forward.1} parent=107 // loop_footer
                  %s1030 = sadd.s32 1, %s1026
                $region114: #{kagn_expert_forward.1} parent=107 // loop_footer_branch
                  %1025 = sbr.rel target = $region110
                $region115: #{kagn_expert_forward.1} parent=107 // loop_exit
                  _
              $region108: #{kagn_expert_forward.1} parent=92 // pred_fallthru
                _
              // Predicated region
              $region116: #{kagn_expert_forward.1} parent=92 // pred_check
                _
              $region117: #{kagn_expert_forward.1} parent=92 // pred_check_branch
                %1038 = sbr.rel target = $region119
              $region118: #{kagn_expert_forward.1} parent=92 // pred_region
                _
              $region119: #{kagn_expert_forward.1} parent=92 // pred_fallthru
                _
            $region93: #{kagn_expert_forward.1} parent=88 // pred_fallthru
              _
            // Predicated region
            $region94: #{kagn_expert_forward.1} parent=88 // pred_check
              _
            $region95: #{kagn_expert_forward.1} parent=88 // pred_check_branch
              %1008 = sbr.rel target = $region97
            $region96: #{kagn_expert_forward.1} parent=88 // pred_region
              %s1010 = ssub.s32 256, 1
              loop: start=0, step=1, limit=1
              $region98: #{kagn_expert_forward.1} parent=96 // loop_pre_header
                _
              $region99: #{kagn_expert_forward.1} parent=96 // loop_header
                %s1012 = sphi 0, %s1016
                %p1013 = scmp.ge.s32.totalorder %s1012, 1
                %s1017 = sphi %s993, %s993
                %s1018 = sphi %s1002, %s1002
              $region100: #{kagn_expert_forward.1} parent=96 // loop_header_branch
                %1015 = sbr.rel (%p1013) target = $region104
              $region101: #{kagn_expert_forward.1} parent=96 // loop_body
                %v1019 = vld [vmem:[%s1017] sm:%s1010]
                %1020 = vst [vmem:[%s1018] sm:%s1010] %v1019
                %v1021 = vld [vmem:[%s1017 + $0x8] sm:%s1010]
                %1022 = vst [vmem:[%s1018 + $0x10] sm:%s1010] %v1021
              $region102: #{kagn_expert_forward.1} parent=96 // loop_footer
                %s1016 = sadd.s32 1, %s1012
              $region103: #{kagn_expert_forward.1} parent=96 // loop_footer_branch
                %1011 = sbr.rel target = $region99
              $region104: #{kagn_expert_forward.1} parent=96 // loop_exit
                _
            $region97: #{kagn_expert_forward.1} parent=88 // pred_fallthru
              _
          $region89: #{kagn_expert_forward.1} parent=84 // pred_fallthru
            _
          %1039 = vnop
        $region85: #{kagn_expert_forward.1} parent=72 // pred_fallthru
          _
      $region73: #{kagn_expert_forward.1} parent=5 // pred_fallthru
        _
      %p1040 = scmp.le.s32.totalorder 2, %s11
      // Predicated region
      $region120: #{kagn_expert_forward.1} parent=5 // pred_check
        %p1041 = pneg %p1040
      $region121: #{kagn_expert_forward.1} parent=5 // pred_check_branch
        %1043 = sbr.rel (%p1041) target = $region123
      $region122: #{kagn_expert_forward.1} parent=5 // pred_region
        %s1044 = ssub.s32 %s11, 2
        // Predicated region
        $region124: #{kagn_expert_forward.1} parent=122 // pred_check
          %p1045 = pneg %p150
        $region125: #{kagn_expert_forward.1} parent=122 // pred_check_branch
          %1047 = sbr.rel (%p1045) target = $region127
        $region126: #{kagn_expert_forward.1} parent=122 // pred_region
          %s1048 = sand.u32 %s135, 1
          %s1049 = sand.u32 %s135, 1
          %s1050 = smul.addr %s1049, 16
          %s1051 = scalar_lea.vmem [#allocation7], %s1050
        $region127: #{kagn_expert_forward.1} parent=122 // pred_fallthru
          _
      $region123: #{kagn_expert_forward.1} parent=5 // pred_fallthru
        _
    $region6: #{kagn_expert_forward.1} parent=1 // loop_footer
      %s15 = sadd.s32 1, %s11
    $region7: #{kagn_expert_forward.1} parent=1 // loop_footer_branch
      %10 = sbr.rel target = $region3
    $region8: #{kagn_expert_forward.1} parent=1 // loop_exit
      _
    %1052 = vsyncpa [#allocation5], 1
    %s1053 = scalar_lea.sflag [#allocation5], 1
    %1054 = vsyncpa %s1053, 1

</llo_original>
